<compile_context>
chip_gen: v7x
topology: tpu7x:2x2x1
jax: 0.10.0
libtpu: 0.0.40
codegen_flags: <defaults>
</compile_context>

<pallas_src>
import numpy as np
import jax
import jax.numpy as jnp
from jax.experimental import pallas as pl
from jax.experimental.pallas import tpu as pltpu


def make_nca_kernel(B, C, H, W, hidden, k_steps):
    HW = H * W
    BC = B * C
    BHID = B * hidden

    def kernel(x0_ref, mlast_ref, mfirst_ref, w0_ref, b0_ref, w1_ref,
               out_ref, state_ref):
        # Load the initial state into the resident VMEM scratch once.
        @pl.when(pl.program_id(0) == 0)
        def _():
            state_ref[...] = x0_ref[...]

        # ---- hoisted loop invariants (shared by all K sub-steps) ----------
        is_last = mlast_ref[...] > 0.5        # (BC, HW) bool, col == W-1
        is_first = mfirst_ref[...] > 0.5      # (BC, HW) bool, col == 0
        w0 = w0_ref[...]                      # (B*hidden, 3*B*C) block-diag
        w1 = w1_ref[...]                      # (B*C, B*hidden)   block-diag
        b0 = jnp.broadcast_to(b0_ref[...], (BHID, HW))   # hoisted broadcast

        def nbr(a, k):
            # Neighbour at flat offset +k, circular within each (b, c) row:
            #   out[..., m] = a[..., (m + k) % HW]
            # pltpu.roll matches jnp.roll (out[m] = in[(m - shift) % n]) and
            # wants a non-negative shift, hence (-k) % HW.
            return pltpu.roll(a, (-k) % HW, axis=1)

        x = state_ref[...]                    # (B*C, HW) f32

        for k in range(k_steps):              # static unroll of K sub-steps
            # ---- 3x3 circular Sobel stencil, separable form ---------------
            # W-neighbours: flat +-1 crosses row boundaries only at the first
            # / last column; fix those columns with the wrap shifts.
            xe = jnp.where(is_last, nbr(x, 1 - W), nbr(x, 1))    # x(i, j+1)
            xw = jnp.where(is_first, nbr(x, W - 1), nbr(x, -1))  # x(i, j-1)
            t = xe - xw                        # [-1, 0, 1] along W
            sm = xw + 2.0 * x + xe             # [ 1, 2, 1] along W
            # H-neighbours: flat +-W wraps correctly within each HW row.
            y1 = (nbr(t, -W) + 2.0 * t + nbr(t, W)) * 0.125      # Sobel-x
            y2 = (nbr(sm, W) - nbr(sm, -W)) * 0.125              # Sobel-y

            # ---- fc0 -> relu -> fc1 : two lane-dense MXU pushes ------------
            feat = jnp.concatenate([x, y1, y2], axis=0)          # (3*BC, HW)
            h = jnp.dot(w0, feat, preferred_element_type=jnp.float32) + b0
            h = jnp.maximum(h, 0.0)                              # (BHID, HW)
            d = jnp.dot(w1, h, preferred_element_type=jnp.float32)
            x = x + d                                            # (BC, HW)
            out_ref[k] = x                     # lane-dense store from registers

        state_ref[...] = x                     # carry state to next grid iter

    return kernel


def _pick_block_steps(steps, max_block):
    """Largest divisor of `steps` that is <= max_block (so steps % K == 0)."""
    for k in range(min(max_block, steps), 0, -1):
        if steps % k == 0:
            return k
    return 1


def nca_forward(x_nchw, w0, b0, w1, steps=1, max_steps_per_block=4):
    """Matches NCAModel.forward: returns [x, x_1, ..., x_steps], each NCHW.

    Weights in torch layout: w0 (hidden, 3C), b0 (hidden,), w1 (C, hidden).
    """
    B, C, H, W = x_nchw.shape
    hidden = w0.shape[0]
    HW = H * W
    BC = B * C
    if steps == 0:
        return [x_nchw]

    K = _pick_block_steps(steps, max_steps_per_block)
    grid = (steps // K,)

    x_flat = x_nchw.reshape(BC, HW).astype(jnp.float32)   # free contiguous reshape

    # Column-boundary fixup masks for the flat +-1 shifts (f32, pre-broadcast).
    col = np.arange(HW, dtype=np.int32) % W
    m_last = jnp.asarray(np.tile((col == W - 1).astype(np.float32), (BC, 1)))
    m_first = jnp.asarray(np.tile((col == 0).astype(np.float32), (BC, 1)))

    # Fold batch into the matmul M dim with block-diagonal weights so fc0/fc1
    # are single (B*hidden, 3*B*C) @ (3*B*C, HW) and (B*C, B*hidden) @ (., HW)
    # MXU pushes covering all batches at once.
    w0 = w0.astype(jnp.float32)
    w1 = w1.astype(jnp.float32)
    b0 = b0.astype(jnp.float32)
    eye_b = jnp.eye(B, dtype=jnp.float32)
    w0x, w0y, w0z = w0[:, :C], w0[:, C:2 * C], w0[:, 2 * C:]
    w0_big = jnp.concatenate(
        [jnp.kron(eye_b, w0x), jnp.kron(eye_b, w0y), jnp.kron(eye_b, w0z)],
        axis=1)                                            # (B*hidden, 3*B*C)
    b0_big = jnp.tile(b0, B).reshape(B * hidden, 1)        # (B*hidden, 1)
    w1_big = jnp.kron(eye_b, w1)                           # (B*C, B*hidden)

    full = lambda s: (0, 0)

    out = pl.pallas_call(
        make_nca_kernel(B, C, H, W, hidden, K),
        out_shape=jax.ShapeDtypeStruct((steps, BC, HW), jnp.float32),
        grid_spec=pltpu.PrefetchScalarGridSpec(
            num_scalar_prefetch=0,
            grid=grid,
            in_specs=[
                pl.BlockSpec((BC, HW), full),               # initial state
                pl.BlockSpec((BC, HW), full),               # col == W-1 mask
                pl.BlockSpec((BC, HW), full),               # col == 0 mask
                pl.BlockSpec((B * hidden, 3 * BC), full),   # block-diag W0
                pl.BlockSpec((B * hidden, 1), full),        # stacked b0
                pl.BlockSpec((BC, B * hidden), full),       # block-diag W1
            ],
            out_specs=pl.BlockSpec((K, BC, HW), lambda s: (s, 0, 0)),
            scratch_shapes=[pltpu.VMEM((BC, HW), jnp.float32)],
        ),
        compiler_params=pltpu.CompilerParams(
            dimension_semantics=("arbitrary",)),            # steps are sequential
    )(x_flat, m_last, m_first, w0_big, b0_big, w1_big)

    out = out.reshape(steps, B, C, H, W).astype(x_nchw.dtype)
    return [x_nchw] + [out[s] for s in range(steps)]


# ---------------- pure NumPy (float64) reference --------------------------
def ref_update_np(x, w0, b0, w1):
    B, C, H, W = x.shape
    xp = np.pad(x, ((0, 0), (0, 0), (1, 1), (1, 1)), mode="wrap")
    kx = np.outer([1, 2, 1], [-1, 0, 1]) / 8.0
    ky = kx.T

    def dwconv(k):
        out = np.zeros_like(x)
        for a in range(3):
            for b in range(3):
                out += k[a, b] * xp[:, :, a:a + H, b:b + W]
        return out

    y1, y2 = dwconv(kx), dwconv(ky)
    feat = np.concatenate([x, y1, y2], axis=1).transpose(0, 2, 3, 1)  # (B,H,W,3C)
    h = np.maximum(feat @ w0.T + b0, 0.0)
    d = h @ w1.T                                                      # (B,H,W,C)
    return x + d.transpose(0, 3, 1, 2)


if __name__ == "__main__":
    B, C, H, W = 2, 4, 16, 16
    HIDDEN = 32
    STEPS = 8          # with max_steps_per_block=4 -> grid=(2,), 4 steps each

    key = jax.random.PRNGKey(0)
    k_x, k_w0, k_b0, k_w1 = jax.random.split(key, 4)

    x = jax.random.normal(k_x, (B, C, H, W), dtype=jnp.float32)
    # fc0: Linear(3C -> hidden), torch layout (hidden, 3C)
    w0 = 0.1 * jax.random.normal(k_w0, (HIDDEN, 3 * C), dtype=jnp.float32)
    b0 = 0.1 * jax.random.normal(k_b0, (HIDDEN,), dtype=jnp.float32)
    # fc1: Linear(hidden -> C, bias=False), torch layout (C, hidden).
    # torch zero-inits fc1; use small random weights so the kernel is exercised.
    w1 = 0.1 * jax.random.normal(k_w1, (C, HIDDEN), dtype=jnp.float32)

    seq = nca_forward(x, w0, b0, w1, steps=STEPS, max_steps_per_block=4)
    seq = [jax.block_until_ready(s) for s in seq]
    assert len(seq) == STEPS + 1

    # Verify against a float64 NumPy reference (avoids TPU default-precision
    # matmuls in the reference path).
    np.testing.assert_array_equal(np.asarray(seq[0]), np.asarray(x))
    xr = np.asarray(x, np.float64)
    w0_np, b0_np, w1_np = (np.asarray(a, np.float64) for a in (w0, b0, w1))
    for step in range(STEPS):
        xr = ref_update_np(xr, w0_np, b0_np, w1_np)
        np.testing.assert_allclose(np.asarray(seq[step + 1], np.float64), xr,
                                   rtol=1e-4, atol=1e-4)

    print("KERNEL_OK")
</pallas_src>

<mosaic_0001>
module attributes {stable_mosaic.version = 11 : i64} {
  func.func @kernel(%arg0: i32, %arg1: memref<8x256xf32, #tpu.memory_space<vmem>>, %arg2: memref<8x256xf32, #tpu.memory_space<vmem>>, %arg3: memref<8x256xf32, #tpu.memory_space<vmem>>, %arg4: memref<64x24xf32, #tpu.memory_space<vmem>>, %arg5: memref<64x1xf32, #tpu.memory_space<vmem>>, %arg6: memref<8x64xf32, #tpu.memory_space<vmem>>, %arg7: memref<4x8x256xf32, #tpu.memory_space<vmem>>, %arg8: memref<8x256xf32, #tpu.memory_space<vmem>>) attributes {dimension_semantics = [#tpu.dimension_semantics<arbitrary>], iteration_bounds = array<i64: 2>, scalar_prefetch = 0 : i64, scratch_operands = 1 : i64, tpu.core_type = #tpu.core_type<tc>, window_params = [{pipeline_mode = #tpu.pipeline_mode<synchronous>, transform_indices = @transform_0, window_bounds = array<i64: 8, 256>}, {pipeline_mode = #tpu.pipeline_mode<synchronous>, transform_indices = @transform_1, window_bounds = array<i64: 8, 256>}, {pipeline_mode = #tpu.pipeline_mode<synchronous>, transform_indices = @transform_2, window_bounds = array<i64: 8, 256>}, {pipeline_mode = #tpu.pipeline_mode<synchronous>, transform_indices = @transform_3, window_bounds = array<i64: 64, 24>}, {pipeline_mode = #tpu.pipeline_mode<synchronous>, transform_indices = @transform_4, window_bounds = array<i64: 64, 1>}, {pipeline_mode = #tpu.pipeline_mode<synchronous>, transform_indices = @transform_5, window_bounds = array<i64: 8, 64>}, {transform_indices = @transform_6, window_bounds = array<i64: 4, 8, 256>}]} {
    %c0_i32 = arith.constant 0 : i32
    %0 = arith.cmpi eq, %arg0, %c0_i32 : i32
    %1 = arith.extui %0 : i1 to i32
    %c0_i32_0 = arith.constant 0 : i32
    %2 = arith.cmpi ne, %1, %c0_i32_0 : i32
    scf.if %2 {
      %c0_78 = arith.constant 0 : index
      %c0_79 = arith.constant 0 : index
      %152 = vector.load %arg1[%c0_78, %c0_79] : memref<8x256xf32, #tpu.memory_space<vmem>>, vector<8x256xf32>
      %c0_80 = arith.constant 0 : index
      %c0_81 = arith.constant 0 : index
      %153 = vector.load %arg8[%c0_80, %c0_81] : memref<8x256xf32, #tpu.memory_space<vmem>>, vector<8x256xf32>
      tpu.vector_store %arg8[%c0_80, %c0_81], %152 {strides = array<i32>} : memref<8x256xf32, #tpu.memory_space<vmem>>, vector<8x256xf32>,
    } else {
    }
    %c0 = arith.constant 0 : index
    %c0_1 = arith.constant 0 : index
    %3 = vector.load %arg2[%c0, %c0_1] : memref<8x256xf32, #tpu.memory_space<vmem>>, vector<8x256xf32>
    %cst = arith.constant 5.000000e-01 : f32
    %4 = vector.broadcast %cst : f32 to vector<8x256xf32>
    %5 = arith.cmpf ogt, %3, %4 : vector<8x256xf32>
    %c0_2 = arith.constant 0 : index
    %c0_3 = arith.constant 0 : index
    %6 = vector.load %arg3[%c0_2, %c0_3] : memref<8x256xf32, #tpu.memory_space<vmem>>, vector<8x256xf32>
    %cst_4 = arith.constant 5.000000e-01 : f32
    %7 = vector.broadcast %cst_4 : f32 to vector<8x256xf32>
    %8 = arith.cmpf ogt, %6, %7 : vector<8x256xf32>
    %c0_5 = arith.constant 0 : index
    %c0_6 = arith.constant 0 : index
    %9 = vector.load %arg4[%c0_5, %c0_6] : memref<64x24xf32, #tpu.memory_space<vmem>>, vector<64x24xf32>
    %c0_7 = arith.constant 0 : index
    %c0_8 = arith.constant 0 : index
    %10 = vector.load %arg6[%c0_7, %c0_8] : memref<8x64xf32, #tpu.memory_space<vmem>>, vector<8x64xf32>
    %c0_9 = arith.constant 0 : index
    %c0_10 = arith.constant 0 : index
    %11 = vector.load %arg5[%c0_9, %c0_10] : memref<64x1xf32, #tpu.memory_space<vmem>>, vector<64x1xf32>
    %12 = vector.shape_cast %11 : vector<64x1xf32> to vector<64x1xf32>
    %13 = vector.broadcast %12 : vector<64x1xf32> to vector<64x256xf32>
    %c0_11 = arith.constant 0 : index
    %c0_12 = arith.constant 0 : index
    %14 = vector.load %arg8[%c0_11, %c0_12] : memref<8x256xf32, #tpu.memory_space<vmem>>, vector<8x256xf32>
    %c15_i32 = arith.constant 15 : i32
    %15 = tpu.dynamic_rotate %14 by %c15_i32 dim 1 : vector<8x256xf32>, i32 -> vector<8x256xf32>
    %c255_i32 = arith.constant 255 : i32
    %16 = tpu.dynamic_rotate %14 by %c255_i32 dim 1 : vector<8x256xf32>, i32 -> vector<8x256xf32>
    %17 = arith.select %5, %15, %16 : vector<8x256xi1>, vector<8x256xf32>
    %c241_i32 = arith.constant 241 : i32
    %18 = tpu.dynamic_rotate %14 by %c241_i32 dim 1 : vector<8x256xf32>, i32 -> vector<8x256xf32>
    %c1_i32 = arith.constant 1 : i32
    %19 = tpu.dynamic_rotate %14 by %c1_i32 dim 1 : vector<8x256xf32>, i32 -> vector<8x256xf32>
    %20 = arith.select %8, %18, %19 : vector<8x256xi1>, vector<8x256xf32>
    %21 = arith.subf %17, %20 : vector<8x256xf32>
    %cst_13 = arith.constant 2.000000e+00 : f32
    %22 = vector.broadcast %cst_13 : f32 to vector<8x256xf32>
    %23 = arith.mulf %22, %14 : vector<8x256xf32>
    %24 = arith.addf %20, %23 : vector<8x256xf32>
    %25 = arith.addf %24, %17 : vector<8x256xf32>
    %c16_i32 = arith.constant 16 : i32
    %26 = tpu.dynamic_rotate %21 by %c16_i32 dim 1 : vector<8x256xf32>, i32 -> vector<8x256xf32>
    %cst_14 = arith.constant 2.000000e+00 : f32
    %27 = vector.broadcast %cst_14 : f32 to vector<8x256xf32>
    %28 = arith.mulf %27, %21 : vector<8x256xf32>
    %29 = arith.addf %26, %28 : vector<8x256xf32>
    %c240_i32 = arith.constant 240 : i32
    %30 = tpu.dynamic_rotate %21 by %c240_i32 dim 1 : vector<8x256xf32>, i32 -> vector<8x256xf32>
    %31 = arith.addf %29, %30 : vector<8x256xf32>
    %cst_15 = arith.constant 1.250000e-01 : f32
    %32 = vector.broadcast %cst_15 : f32 to vector<8x256xf32>
    %33 = arith.mulf %31, %32 : vector<8x256xf32>
    %c240_i32_16 = arith.constant 240 : i32
    %34 = tpu.dynamic_rotate %25 by %c240_i32_16 dim 1 : vector<8x256xf32>, i32 -> vector<8x256xf32>
    %c16_i32_17 = arith.constant 16 : i32
    %35 = tpu.dynamic_rotate %25 by %c16_i32_17 dim 1 : vector<8x256xf32>, i32 -> vector<8x256xf32>
    %36 = arith.subf %34, %35 : vector<8x256xf32>
    %cst_18 = arith.constant 1.250000e-01 : f32
    %37 = vector.broadcast %cst_18 : f32 to vector<8x256xf32>
    %38 = arith.mulf %36, %37 : vector<8x256xf32>
    %39 = tpu.concatenate %14, %33, %38 in 0 : vector<8x256xf32>, vector<8x256xf32>, vector<8x256xf32> -> vector<24x256xf32>
    %cst_19 = arith.constant dense<0.000000e+00> : vector<64x256xf32>
    %40 = tpu.matmul %9, %39, %cst_19 {dimension_numbers = #tpu.dot_dimension_numbers<[1], [0], [0], [1], [0, 0, 1, 1], [], []>} : vector<64x24xf32>, vector<24x256xf32>, vector<64x256xf32> -> vector<64x256xf32>
    %41 = arith.addf %40, %13 : vector<64x256xf32>
    %cst_20 = arith.constant 0.000000e+00 : f32
    %42 = vector.broadcast %cst_20 : f32 to vector<64x256xf32>
    %43 = arith.maximumf %41, %42 : vector<64x256xf32>
    %cst_21 = arith.constant dense<0.000000e+00> : vector<8x256xf32>
    %44 = tpu.matmul %10, %43, %cst_21 {dimension_numbers = #tpu.dot_dimension_numbers<[1], [0], [0], [1], [0, 0, 1, 1], [], []>} : vector<8x64xf32>, vector<64x256xf32>, vector<8x256xf32> -> vector<8x256xf32>
    %45 = arith.addf %14, %44 : vector<8x256xf32>
    %c0_22 = arith.constant 0 : index
    %c0_23 = arith.constant 0 : index
    %c0_24 = arith.constant 0 : index
    %46 = vector.load %arg7[%c0_22, %c0_23, %c0_24] : memref<4x8x256xf32, #tpu.memory_space<vmem>>, vector<1x8x256xf32>
    %47 = vector.shape_cast %46 : vector<1x8x256xf32> to vector<8x256xf32>
    %48 = vector.shape_cast %45 : vector<8x256xf32> to vector<1x8x256xf32>
    tpu.vector_store %arg7[%c0_22, %c0_23, %c0_24], %48 {strides = array<i32>} : memref<4x8x256xf32, #tpu.memory_space<vmem>>, vector<1x8x256xf32>,
    %c15_i32_25 = arith.constant 15 : i32
    %49 = tpu.dynamic_rotate %45 by %c15_i32_25 dim 1 : vector<8x256xf32>, i32 -> vector<8x256xf32>
    %c255_i32_26 = arith.constant 255 : i32
    %50 = tpu.dynamic_rotate %45 by %c255_i32_26 dim 1 : vector<8x256xf32>, i32 -> vector<8x256xf32>
    %51 = arith.select %5, %49, %50 : vector<8x256xi1>, vector<8x256xf32>
    %c241_i32_27 = arith.constant 241 : i32
    %52 = tpu.dynamic_rotate %45 by %c241_i32_27 dim 1 : vector<8x256xf32>, i32 -> vector<8x256xf32>
    %c1_i32_28 = arith.constant 1 : i32
    %53 = tpu.dynamic_rotate %45 by %c1_i32_28 dim 1 : vector<8x256xf32>, i32 -> vector<8x256xf32>
    %54 = arith.select %8, %52, %53 : vector<8x256xi1>, vector<8x256xf32>
    %55 = arith.subf %51, %54 : vector<8x256xf32>
    %cst_29 = arith.constant 2.000000e+00 : f32
    %56 = vector.broadcast %cst_29 : f32 to vector<8x256xf32>
    %57 = arith.mulf %56, %45 : vector<8x256xf32>
    %58 = arith.addf %54, %57 : vector<8x256xf32>
    %59 = arith.addf %58, %51 : vector<8x256xf32>
    %c16_i32_30 = arith.constant 16 : i32
    %60 = tpu.dynamic_rotate %55 by %c16_i32_30 dim 1 : vector<8x256xf32>, i32 -> vector<8x256xf32>
    %cst_31 = arith.constant 2.000000e+00 : f32
    %61 = vector.broadcast %cst_31 : f32 to vector<8x256xf32>
    %62 = arith.mulf %61, %55 : vector<8x256xf32>
    %63 = arith.addf %60, %62 : vector<8x256xf32>
    %c240_i32_32 = arith.constant 240 : i32
    %64 = tpu.dynamic_rotate %55 by %c240_i32_32 dim 1 : vector<8x256xf32>, i32 -> vector<8x256xf32>
    %65 = arith.addf %63, %64 : vector<8x256xf32>
    %cst_33 = arith.constant 1.250000e-01 : f32
    %66 = vector.broadcast %cst_33 : f32 to vector<8x256xf32>
    %67 = arith.mulf %65, %66 : vector<8x256xf32>
    %c240_i32_34 = arith.constant 240 : i32
    %68 = tpu.dynamic_rotate %59 by %c240_i32_34 dim 1 : vector<8x256xf32>, i32 -> vector<8x256xf32>
    %c16_i32_35 = arith.constant 16 : i32
    %69 = tpu.dynamic_rotate %59 by %c16_i32_35 dim 1 : vector<8x256xf32>, i32 -> vector<8x256xf32>
    %70 = arith.subf %68, %69 : vector<8x256xf32>
    %cst_36 = arith.constant 1.250000e-01 : f32
    %71 = vector.broadcast %cst_36 : f32 to vector<8x256xf32>
    %72 = arith.mulf %70, %71 : vector<8x256xf32>
    %73 = tpu.concatenate %45, %67, %72 in 0 : vector<8x256xf32>, vector<8x256xf32>, vector<8x256xf32> -> vector<24x256xf32>
    %cst_37 = arith.constant dense<0.000000e+00> : vector<64x256xf32>
    %74 = tpu.matmul %9, %73, %cst_37 {dimension_numbers = #tpu.dot_dimension_numbers<[1], [0], [0], [1], [0, 0, 1, 1], [], []>} : vector<64x24xf32>, vector<24x256xf32>, vector<64x256xf32> -> vector<64x256xf32>
    %75 = arith.addf %74, %13 : vector<64x256xf32>
    %cst_38 = arith.constant 0.000000e+00 : f32
    %76 = vector.broadcast %cst_38 : f32 to vector<64x256xf32>
    %77 = arith.maximumf %75, %76 : vector<64x256xf32>
    %cst_39 = arith.constant dense<0.000000e+00> : vector<8x256xf32>
    %78 = tpu.matmul %10, %77, %cst_39 {dimension_numbers = #tpu.dot_dimension_numbers<[1], [0], [0], [1], [0, 0, 1, 1], [], []>} : vector<8x64xf32>, vector<64x256xf32>, vector<8x256xf32> -> vector<8x256xf32>
    %79 = arith.addf %45, %78 : vector<8x256xf32>
    %c1 = arith.constant 1 : index
    %c0_40 = arith.constant 0 : index
    %c0_41 = arith.constant 0 : index
    %80 = vector.load %arg7[%c1, %c0_40, %c0_41] : memref<4x8x256xf32, #tpu.memory_space<vmem>>, vector<1x8x256xf32>
    %81 = vector.shape_cast %80 : vector<1x8x256xf32> to vector<8x256xf32>
    %82 = vector.shape_cast %79 : vector<8x256xf32> to vector<1x8x256xf32>
    tpu.vector_store %arg7[%c1, %c0_40, %c0_41], %82 {strides = array<i32>} : memref<4x8x256xf32, #tpu.memory_space<vmem>>, vector<1x8x256xf32>,
    %c15_i32_42 = arith.constant 15 : i32
    %83 = tpu.dynamic_rotate %79 by %c15_i32_42 dim 1 : vector<8x256xf32>, i32 -> vector<8x256xf32>
    %c255_i32_43 = arith.constant 255 : i32
    %84 = tpu.dynamic_rotate %79 by %c255_i32_43 dim 1 : vector<8x256xf32>, i32 -> vector<8x256xf32>
    %85 = arith.select %5, %83, %84 : vector<8x256xi1>, vector<8x256xf32>
    %c241_i32_44 = arith.constant 241 : i32
    %86 = tpu.dynamic_rotate %79 by %c241_i32_44 dim 1 : vector<8x256xf32>, i32 -> vector<8x256xf32>
    %c1_i32_45 = arith.constant 1 : i32
    %87 = tpu.dynamic_rotate %79 by %c1_i32_45 dim 1 : vector<8x256xf32>, i32 -> vector<8x256xf32>
    %88 = arith.select %8, %86, %87 : vector<8x256xi1>, vector<8x256xf32>
    %89 = arith.subf %85, %88 : vector<8x256xf32>
    %cst_46 = arith.constant 2.000000e+00 : f32
    %90 = vector.broadcast %cst_46 : f32 to vector<8x256xf32>
    %91 = arith.mulf %90, %79 : vector<8x256xf32>
    %92 = arith.addf %88, %91 : vector<8x256xf32>
    %93 = arith.addf %92, %85 : vector<8x256xf32>
    %c16_i32_47 = arith.constant 16 : i32
    %94 = tpu.dynamic_rotate %89 by %c16_i32_47 dim 1 : vector<8x256xf32>, i32 -> vector<8x256xf32>
    %cst_48 = arith.constant 2.000000e+00 : f32
    %95 = vector.broadcast %cst_48 : f32 to vector<8x256xf32>
    %96 = arith.mulf %95, %89 : vector<8x256xf32>
    %97 = arith.addf %94, %96 : vector<8x256xf32>
    %c240_i32_49 = arith.constant 240 : i32
    %98 = tpu.dynamic_rotate %89 by %c240_i32_49 dim 1 : vector<8x256xf32>, i32 -> vector<8x256xf32>
    %99 = arith.addf %97, %98 : vector<8x256xf32>
    %cst_50 = arith.constant 1.250000e-01 : f32
    %100 = vector.broadcast %cst_50 : f32 to vector<8x256xf32>
    %101 = arith.mulf %99, %100 : vector<8x256xf32>
    %c240_i32_51 = arith.constant 240 : i32
    %102 = tpu.dynamic_rotate %93 by %c240_i32_51 dim 1 : vector<8x256xf32>, i32 -> vector<8x256xf32>
    %c16_i32_52 = arith.constant 16 : i32
    %103 = tpu.dynamic_rotate %93 by %c16_i32_52 dim 1 : vector<8x256xf32>, i32 -> vector<8x256xf32>
    %104 = arith.subf %102, %103 : vector<8x256xf32>
    %cst_53 = arith.constant 1.250000e-01 : f32
    %105 = vector.broadcast %cst_53 : f32 to vector<8x256xf32>
    %106 = arith.mulf %104, %105 : vector<8x256xf32>
    %107 = tpu.concatenate %79, %101, %106 in 0 : vector<8x256xf32>, vector<8x256xf32>, vector<8x256xf32> -> vector<24x256xf32>
    %cst_54 = arith.constant dense<0.000000e+00> : vector<64x256xf32>
    %108 = tpu.matmul %9, %107, %cst_54 {dimension_numbers = #tpu.dot_dimension_numbers<[1], [0], [0], [1], [0, 0, 1, 1], [], []>} : vector<64x24xf32>, vector<24x256xf32>, vector<64x256xf32> -> vector<64x256xf32>
    %109 = arith.addf %108, %13 : vector<64x256xf32>
    %cst_55 = arith.constant 0.000000e+00 : f32
    %110 = vector.broadcast %cst_55 : f32 to vector<64x256xf32>
    %111 = arith.maximumf %109, %110 : vector<64x256xf32>
    %cst_56 = arith.constant dense<0.000000e+00> : vector<8x256xf32>
    %112 = tpu.matmul %10, %111, %cst_56 {dimension_numbers = #tpu.dot_dimension_numbers<[1], [0], [0], [1], [0, 0, 1, 1], [], []>} : vector<8x64xf32>, vector<64x256xf32>, vector<8x256xf32> -> vector<8x256xf32>
    %113 = arith.addf %79, %112 : vector<8x256xf32>
    %c2 = arith.constant 2 : index
    %c0_57 = arith.constant 0 : index
    %c0_58 = arith.constant 0 : index
    %114 = vector.load %arg7[%c2, %c0_57, %c0_58] : memref<4x8x256xf32, #tpu.memory_space<vmem>>, vector<1x8x256xf32>
    %115 = vector.shape_cast %114 : vector<1x8x256xf32> to vector<8x256xf32>
    %116 = vector.shape_cast %113 : vector<8x256xf32> to vector<1x8x256xf32>
    tpu.vector_store %arg7[%c2, %c0_57, %c0_58], %116 {strides = array<i32>} : memref<4x8x256xf32, #tpu.memory_space<vmem>>, vector<1x8x256xf32>,
    %c15_i32_59 = arith.constant 15 : i32
    %117 = tpu.dynamic_rotate %113 by %c15_i32_59 dim 1 : vector<8x256xf32>, i32 -> vector<8x256xf32>
    %c255_i32_60 = arith.constant 255 : i32
    %118 = tpu.dynamic_rotate %113 by %c255_i32_60 dim 1 : vector<8x256xf32>, i32 -> vector<8x256xf32>
    %119 = arith.select %5, %117, %118 : vector<8x256xi1>, vector<8x256xf32>
    %c241_i32_61 = arith.constant 241 : i32
    %120 = tpu.dynamic_rotate %113 by %c241_i32_61 dim 1 : vector<8x256xf32>, i32 -> vector<8x256xf32>
    %c1_i32_62 = arith.constant 1 : i32
    %121 = tpu.dynamic_rotate %113 by %c1_i32_62 dim 1 : vector<8x256xf32>, i32 -> vector<8x256xf32>
    %122 = arith.select %8, %120, %121 : vector<8x256xi1>, vector<8x256xf32>
    %123 = arith.subf %119, %122 : vector<8x256xf32>
    %cst_63 = arith.constant 2.000000e+00 : f32
    %124 = vector.broadcast %cst_63 : f32 to vector<8x256xf32>
    %125 = arith.mulf %124, %113 : vector<8x256xf32>
    %126 = arith.addf %122, %125 : vector<8x256xf32>
    %127 = arith.addf %126, %119 : vector<8x256xf32>
    %c16_i32_64 = arith.constant 16 : i32
    %128 = tpu.dynamic_rotate %123 by %c16_i32_64 dim 1 : vector<8x256xf32>, i32 -> vector<8x256xf32>
    %cst_65 = arith.constant 2.000000e+00 : f32
    %129 = vector.broadcast %cst_65 : f32 to vector<8x256xf32>
    %130 = arith.mulf %129, %123 : vector<8x256xf32>
    %131 = arith.addf %128, %130 : vector<8x256xf32>
    %c240_i32_66 = arith.constant 240 : i32
    %132 = tpu.dynamic_rotate %123 by %c240_i32_66 dim 1 : vector<8x256xf32>, i32 -> vector<8x256xf32>
    %133 = arith.addf %131, %132 : vector<8x256xf32>
    %cst_67 = arith.constant 1.250000e-01 : f32
    %134 = vector.broadcast %cst_67 : f32 to vector<8x256xf32>
    %135 = arith.mulf %133, %134 : vector<8x256xf32>
    %c240_i32_68 = arith.constant 240 : i32
    %136 = tpu.dynamic_rotate %127 by %c240_i32_68 dim 1 : vector<8x256xf32>, i32 -> vector<8x256xf32>
    %c16_i32_69 = arith.constant 16 : i32
    %137 = tpu.dynamic_rotate %127 by %c16_i32_69 dim 1 : vector<8x256xf32>, i32 -> vector<8x256xf32>
    %138 = arith.subf %136, %137 : vector<8x256xf32>
    %cst_70 = arith.constant 1.250000e-01 : f32
    %139 = vector.broadcast %cst_70 : f32 to vector<8x256xf32>
    %140 = arith.mulf %138, %139 : vector<8x256xf32>
    %141 = tpu.concatenate %113, %135, %140 in 0 : vector<8x256xf32>, vector<8x256xf32>, vector<8x256xf32> -> vector<24x256xf32>
    %cst_71 = arith.constant dense<0.000000e+00> : vector<64x256xf32>
    %142 = tpu.matmul %9, %141, %cst_71 {dimension_numbers = #tpu.dot_dimension_numbers<[1], [0], [0], [1], [0, 0, 1, 1], [], []>} : vector<64x24xf32>, vector<24x256xf32>, vector<64x256xf32> -> vector<64x256xf32>
    %143 = arith.addf %142, %13 : vector<64x256xf32>
    %cst_72 = arith.constant 0.000000e+00 : f32
    %144 = vector.broadcast %cst_72 : f32 to vector<64x256xf32>
    %145 = arith.maximumf %143, %144 : vector<64x256xf32>
    %cst_73 = arith.constant dense<0.000000e+00> : vector<8x256xf32>
    %146 = tpu.matmul %10, %145, %cst_73 {dimension_numbers = #tpu.dot_dimension_numbers<[1], [0], [0], [1], [0, 0, 1, 1], [], []>} : vector<8x64xf32>, vector<64x256xf32>, vector<8x256xf32> -> vector<8x256xf32>
    %147 = arith.addf %113, %146 : vector<8x256xf32>
    %c3 = arith.constant 3 : index
    %c0_74 = arith.constant 0 : index
    %c0_75 = arith.constant 0 : index
    %148 = vector.load %arg7[%c3, %c0_74, %c0_75] : memref<4x8x256xf32, #tpu.memory_space<vmem>>, vector<1x8x256xf32>
    %149 = vector.shape_cast %148 : vector<1x8x256xf32> to vector<8x256xf32>
    %150 = vector.shape_cast %147 : vector<8x256xf32> to vector<1x8x256xf32>
    tpu.vector_store %arg7[%c3, %c0_74, %c0_75], %150 {strides = array<i32>} : memref<4x8x256xf32, #tpu.memory_space<vmem>>, vector<1x8x256xf32>,
    %c0_76 = arith.constant 0 : index
    %c0_77 = arith.constant 0 : index
    %151 = vector.load %arg8[%c0_76, %c0_77] : memref<8x256xf32, #tpu.memory_space<vmem>>, vector<8x256xf32>
    tpu.vector_store %arg8[%c0_76, %c0_77], %147 {strides = array<i32>} : memref<8x256xf32, #tpu.memory_space<vmem>>, vector<8x256xf32>,
    return
  }
  func.func @transform_0(%arg0: i32) -> (i32, i32) {
    %c0_i32 = arith.constant 0 : i32
    %c0_i32_0 = arith.constant 0 : i32
    %c0_i32_1 = arith.constant 0 : i32
    return %c0_i32, %c0_i32_0 : i32, i32
  }
  func.func @transform_1(%arg0: i32) -> (i32, i32) {
    %c0_i32 = arith.constant 0 : i32
    %c0_i32_0 = arith.constant 0 : i32
    %c0_i32_1 = arith.constant 0 : i32
    return %c0_i32, %c0_i32_0 : i32, i32
  }
  func.func @transform_2(%arg0: i32) -> (i32, i32) {
    %c0_i32 = arith.constant 0 : i32
    %c0_i32_0 = arith.constant 0 : i32
    %c0_i32_1 = arith.constant 0 : i32
    return %c0_i32, %c0_i32_0 : i32, i32
  }
  func.func @transform_3(%arg0: i32) -> (i32, i32) {
    %c0_i32 = arith.constant 0 : i32
    %c0_i32_0 = arith.constant 0 : i32
    %c0_i32_1 = arith.constant 0 : i32
    return %c0_i32, %c0_i32_0 : i32, i32
  }
  func.func @transform_4(%arg0: i32) -> (i32, i32) {
    %c0_i32 = arith.constant 0 : i32
    %c0_i32_0 = arith.constant 0 : i32
    %c0_i32_1 = arith.constant 0 : i32
    return %c0_i32, %c0_i32_0 : i32, i32
  }
  func.func @transform_5(%arg0: i32) -> (i32, i32) {
    %c0_i32 = arith.constant 0 : i32
    %c0_i32_0 = arith.constant 0 : i32
    %c0_i32_1 = arith.constant 0 : i32
    return %c0_i32, %c0_i32_0 : i32, i32
  }
  func.func @transform_6(%arg0: i32) -> (i32, i32, i32) {
    %c0_i32 = arith.constant 0 : i32
    %c0_i32_0 = arith.constant 0 : i32
    %c0_i32_1 = arith.constant 0 : i32
    return %arg0, %c0_i32, %c0_i32_0 : i32, i32, i32
  }
}

</mosaic_0001>

<llo_original>
// kernel: tpu_custom_call.1
$region0: #{tpu_custom_call.1}
  #allocation0 [shape = 'u32[]', space=smem, size = 0x4, offset = 0x4, fixed_abs, tag = 'smem constant byte address 0x4 - core index']
  #allocation1 [shape = 'u32[144,128]{1,0:T(1,128)}', space=vmem, size = 0x12000, scoped, tag = 'internal scratch']
  #allocation2 [shape = 'f32[8,256]{1,0:T(8,128)}', space=vmem, size = 0x2000, scoped, tag = 'scratch operand']
  %s0 = inlined_call_operand.vmem [shape: f32[8,256], index: 0, kind: input, shape index: {}]
  %s1 = inlined_call_operand.vmem [shape: f32[8,256], index: 1, kind: input, shape index: {}]
  %s2 = inlined_call_operand.vmem [shape: f32[8,256], index: 2, kind: input, shape index: {}]
  %s3 = inlined_call_operand.vmem [shape: f32[64,24], index: 3, kind: input, shape index: {}]
  %s4 = inlined_call_operand.vmem [shape: f32[64,1], index: 4, kind: input, shape index: {}]
  %s5 = inlined_call_operand.vmem [shape: f32[8,64], index: 5, kind: input, shape index: {}]
  %s6 = inlined_call_operand.hbm [shape: f32[8,8,256], index: 6, kind: output, shape index: {}]
  %s7 = sld [smem:[#allocation0]]
  $region61: #{tpu_custom_call.1} parent=0
    _
  %s9 = ssub.s32 1, %s7
  %s10 = scalar_select 0, %s9, %s7
  $region1: #{tpu_custom_call.1} parent=0
    #allocation3 [shape = 'u8[65536]{0}', space=vmem, size = 0x10000, scoped, tag = 'output window, operand 0']
    #allocation4 [shape = 's32[2]{0}', space=sflag, size = 0x8, scoped, tag = 'scoped memory for tpu_custom_call.1']
    %11 = vsyncpa [#allocation4], 0
    %s12 = scalar_lea.sflag [#allocation4], 1
    %13 = vsyncpa %s12, 0
    loop: start=0, step=1, limit=4
    $region2: #{tpu_custom_call.1} parent=1 // loop_pre_header
      _
    $region3: #{tpu_custom_call.1} parent=1 // loop_header
      %s15 = sphi 0, %s19
      %p16 = scmp.ge.s32.totalorder %s15, 4
      %s23 = sphi 0, %s23
      %s25 = sphi 0, %s23
      %s26 = sphi 0, %s25
      %s40 = sphi 0, %s26
      %s44 = sphi 0, %s44
      %s46 = sphi 0, %s44
      %s47 = sphi 0, %s46
      %s61 = sphi 0, %s47
      %s65 = sphi 0, %s65
      %s67 = sphi 0, %s65
      %s68 = sphi 0, %s67
      %s82 = sphi 0, %s68
      %s86 = sphi 0, %s86
      %s88 = sphi 0, %s86
      %s89 = sphi 0, %s88
      %s103 = sphi 0, %s89
      %s107 = sphi 0, %s107
      %s109 = sphi 0, %s107
      %s110 = sphi 0, %s109
      %s124 = sphi 0, %s110
      %s128 = sphi 0, %s128
      %s130 = sphi 0, %s128
      %s131 = sphi 0, %s130
      %s145 = sphi 0, %s131
      %s151 = sphi 0, %s153
      %s154 = sphi 0, %s151
      %s155 = sphi 0, %s154
      %s171 = sphi 0, %s155
    $region4: #{tpu_custom_call.1} parent=1 // loop_header_branch
      %18 = sbr.rel (%p16) target = $region8
    $region5: #{tpu_custom_call.1} parent=1 // loop_body
      %s20 = ssub.s32 %s15, 1
      %s21 = ssub.s32 %s15, 2
      %s22 = sadd.s32 %s15, 1
      %s24 = sadd.s32 %s23, 1
      %p27 = scmp.eq.s32.totalorder %s15, 1
      %p28 = scmp.ne.s32.totalorder %s23, %s25
      %p29 = scmp.eq.s32.totalorder %s15, 0
      %p30 = por %p28, %p29
      %p31 = scmp.ne.s32.totalorder %s23, %s25
      %p32 = scmp.eq.s32.totalorder %s20, 1
      %p33 = por %p31, %p32
      %p34 = scmp.ne.s32.totalorder %s25, %s26
      %p35 = scmp.eq.s32.totalorder %s20, 0
      %p36 = por %p34, %p35
      %p37 = scmp.ne.s32.totalorder %s25, %s26
      %p38 = scmp.eq.s32.totalorder %s21, 1
      %p39 = por %p37, %p38
      %p41 = scmp.ne.s32.totalorder %s26, %s40
      %p42 = scmp.eq.s32.totalorder %s21, 0
      %p43 = por %p41, %p42
      %s45 = sadd.s32 %s44, 1
      %p48 = scmp.eq.s32.totalorder %s15, 1
      %p49 = scmp.ne.s32.totalorder %s44, %s46
      %p50 = scmp.eq.s32.totalorder %s15, 0
      %p51 = por %p49, %p50
      %p52 = scmp.ne.s32.totalorder %s44, %s46
      %p53 = scmp.eq.s32.totalorder %s20, 1
      %p54 = por %p52, %p53
      %p55 = scmp.ne.s32.totalorder %s46, %s47
      %p56 = scmp.eq.s32.totalorder %s20, 0
      %p57 = por %p55, %p56
      %p58 = scmp.ne.s32.totalorder %s46, %s47
      %p59 = scmp.eq.s32.totalorder %s21, 1
      %p60 = por %p58, %p59
      %p62 = scmp.ne.s32.totalorder %s47, %s61
      %p63 = scmp.eq.s32.totalorder %s21, 0
      %p64 = por %p62, %p63
      %s66 = sadd.s32 %s65, 1
      %p69 = scmp.eq.s32.totalorder %s15, 1
      %p70 = scmp.ne.s32.totalorder %s65, %s67
      %p71 = scmp.eq.s32.totalorder %s15, 0
      %p72 = por %p70, %p71
      %p73 = scmp.ne.s32.totalorder %s65, %s67
      %p74 = scmp.eq.s32.totalorder %s20, 1
      %p75 = por %p73, %p74
      %p76 = scmp.ne.s32.totalorder %s67, %s68
      %p77 = scmp.eq.s32.totalorder %s20, 0
      %p78 = por %p76, %p77
      %p79 = scmp.ne.s32.totalorder %s67, %s68
      %p80 = scmp.eq.s32.totalorder %s21, 1
      %p81 = por %p79, %p80
      %p83 = scmp.ne.s32.totalorder %s68, %s82
      %p84 = scmp.eq.s32.totalorder %s21, 0
      %p85 = por %p83, %p84
      %s87 = sadd.s32 %s86, 1
      %p90 = scmp.eq.s32.totalorder %s15, 1
      %p91 = scmp.ne.s32.totalorder %s86, %s88
      %p92 = scmp.eq.s32.totalorder %s15, 0
      %p93 = por %p91, %p92
      %p94 = scmp.ne.s32.totalorder %s86, %s88
      %p95 = scmp.eq.s32.totalorder %s20, 1
      %p96 = por %p94, %p95
      %p97 = scmp.ne.s32.totalorder %s88, %s89
      %p98 = scmp.eq.s32.totalorder %s20, 0
      %p99 = por %p97, %p98
      %p100 = scmp.ne.s32.totalorder %s88, %s89
      %p101 = scmp.eq.s32.totalorder %s21, 1
      %p102 = por %p100, %p101
      %p104 = scmp.ne.s32.totalorder %s89, %s103
      %p105 = scmp.eq.s32.totalorder %s21, 0
      %p106 = por %p104, %p105
      %s108 = sadd.s32 %s107, 1
      %p111 = scmp.eq.s32.totalorder %s15, 1
      %p112 = scmp.ne.s32.totalorder %s107, %s109
      %p113 = scmp.eq.s32.totalorder %s15, 0
      %p114 = por %p112, %p113
      %p115 = scmp.ne.s32.totalorder %s107, %s109
      %p116 = scmp.eq.s32.totalorder %s20, 1
      %p117 = por %p115, %p116
      %p118 = scmp.ne.s32.totalorder %s109, %s110
      %p119 = scmp.eq.s32.totalorder %s20, 0
      %p120 = por %p118, %p119
      %p121 = scmp.ne.s32.totalorder %s109, %s110
      %p122 = scmp.eq.s32.totalorder %s21, 1
      %p123 = por %p121, %p122
      %p125 = scmp.ne.s32.totalorder %s110, %s124
      %p126 = scmp.eq.s32.totalorder %s21, 0
      %p127 = por %p125, %p126
      %s129 = sadd.s32 %s128, 1
      %p132 = scmp.eq.s32.totalorder %s15, 1
      %p133 = scmp.ne.s32.totalorder %s128, %s130
      %p134 = scmp.eq.s32.totalorder %s15, 0
      %p135 = por %p133, %p134
      %p136 = scmp.ne.s32.totalorder %s128, %s130
      %p137 = scmp.eq.s32.totalorder %s20, 1
      %p138 = por %p136, %p137
      %p139 = scmp.ne.s32.totalorder %s130, %s131
      %p140 = scmp.eq.s32.totalorder %s20, 0
      %p141 = por %p139, %p140
      %p142 = scmp.ne.s32.totalorder %s130, %s131
      %p143 = scmp.eq.s32.totalorder %s21, 1
      %p144 = por %p142, %p143
      %p146 = scmp.ne.s32.totalorder %s131, %s145
      %p147 = scmp.eq.s32.totalorder %s21, 0
      %p148 = por %p146, %p147
      %s149 = ssub.s32 %s15, %s22
      %p150 = scmp.eq.s32.totalorder %s149, 0
      %s152 = sadd.s32 %s151, 1
      %s153 = scalar_select %p150, %s151, %s152
      %p156 = pneg %p150
      %p157 = scmp.eq.s32.totalorder %s15, 1
      %p158 = por %p156, %p157
      %p159 = scmp.ne.s32.totalorder %s151, %s154
      %p160 = scmp.eq.s32.totalorder %s15, 0
      %p161 = por %p159, %p160
      %p162 = scmp.ne.s32.totalorder %s151, %s154
      %p163 = scmp.eq.s32.totalorder %s20, 1
      %p164 = por %p162, %p163
      %p165 = scmp.ne.s32.totalorder %s154, %s155
      %p166 = scmp.eq.s32.totalorder %s20, 0
      %p167 = por %p165, %p166
      %p168 = scmp.ne.s32.totalorder %s154, %s155
      %p169 = scmp.eq.s32.totalorder %s21, 1
      %p170 = por %p168, %p169
      %p172 = scmp.ne.s32.totalorder %s155, %s171
      %p173 = scmp.eq.s32.totalorder %s21, 0
      %p174 = por %p172, %p173
      %p175 = scmp.le.s32.totalorder 1, %s15
      %p176 = scmp.lt.s32.totalorder %s15, 3
      %p177 = pnand %p175, %p176
      %p178 = pneg %p177
      // Predicated region
      $region9: #{tpu_custom_call.1} parent=5 // pred_check
        _
      $region10: #{tpu_custom_call.1} parent=5 // pred_check_branch
        %180 = sbr.rel (%p177) target = $region12
      $region11: #{tpu_custom_call.1} parent=5 // pred_region
        %s181 = ssub.s32 %s15, 1
        // Predicated region
        $region13: #{tpu_custom_call.1} parent=11 // pred_check
          %p182 = pneg %p36
        $region14: #{tpu_custom_call.1} parent=11 // pred_check_branch
          %184 = sbr.rel (%p182) target = $region16
        $region15: #{tpu_custom_call.1} parent=11 // pred_region
          _
        $region16: #{tpu_custom_call.1} parent=11 // pred_fallthru
          _
        // Predicated region
        $region17: #{tpu_custom_call.1} parent=11 // pred_check
          %p185 = pneg %p57
        $region18: #{tpu_custom_call.1} parent=11 // pred_check_branch
          %187 = sbr.rel (%p185) target = $region20
        $region19: #{tpu_custom_call.1} parent=11 // pred_region
          _
        $region20: #{tpu_custom_call.1} parent=11 // pred_fallthru
          _
        // Predicated region
        $region21: #{tpu_custom_call.1} parent=11 // pred_check
          %p188 = pneg %p78
        $region22: #{tpu_custom_call.1} parent=11 // pred_check_branch
          %190 = sbr.rel (%p188) target = $region24
        $region23: #{tpu_custom_call.1} parent=11 // pred_region
          _
        $region24: #{tpu_custom_call.1} parent=11 // pred_fallthru
          _
        // Predicated region
        $region25: #{tpu_custom_call.1} parent=11 // pred_check
          %p191 = pneg %p99
        $region26: #{tpu_custom_call.1} parent=11 // pred_check_branch
          %193 = sbr.rel (%p191) target = $region28
        $region27: #{tpu_custom_call.1} parent=11 // pred_region
          _
        $region28: #{tpu_custom_call.1} parent=11 // pred_fallthru
          _
        // Predicated region
        $region29: #{tpu_custom_call.1} parent=11 // pred_check
          %p194 = pneg %p120
        $region30: #{tpu_custom_call.1} parent=11 // pred_check_branch
          %196 = sbr.rel (%p194) target = $region32
        $region31: #{tpu_custom_call.1} parent=11 // pred_region
          _
        $region32: #{tpu_custom_call.1} parent=11 // pred_fallthru
          _
        // Predicated region
        $region33: #{tpu_custom_call.1} parent=11 // pred_check
          %p197 = pneg %p141
        $region34: #{tpu_custom_call.1} parent=11 // pred_check_branch
          %199 = sbr.rel (%p197) target = $region36
        $region35: #{tpu_custom_call.1} parent=11 // pred_region
          _
        $region36: #{tpu_custom_call.1} parent=11 // pred_fallthru
          _
      $region12: #{tpu_custom_call.1} parent=5 // pred_fallthru
        _
      %p200 = scmp.lt.s32.totalorder %s15, 2
      // Predicated region
      $region37: #{tpu_custom_call.1} parent=5 // pred_check
        %p201 = pneg %p200
      $region38: #{tpu_custom_call.1} parent=5 // pred_check_branch
        %203 = sbr.rel (%p201) target = $region40
      $region39: #{tpu_custom_call.1} parent=5 // pred_region
        _
      $region40: #{tpu_custom_call.1} parent=5 // pred_fallthru
        _
      %p204 = scmp.le.s32.totalorder 1, %s15
      %p205 = scmp.lt.s32.totalorder %s15, 3
      %p206 = pnand %p204, %p205
      %p207 = pneg %p206
      // Predicated region
      $region41: #{tpu_custom_call.1} parent=5 // pred_check
        _
      $region42: #{tpu_custom_call.1} parent=5 // pred_check_branch
        %209 = sbr.rel (%p206) target = $region44
      $region43: #{tpu_custom_call.1} parent=5 // pred_region
        %s210 = ssub.s32 %s15, 1
        %p211 = pneg %p36
        %p212 = pneg %p33
        %p213 = pneg %p57
        %p214 = pneg %p54
        %p215 = pneg %p78
        %p216 = pneg %p75
        %p217 = pneg %p99
        %p218 = pneg %p96
        %p219 = pneg %p120
        %p220 = pneg %p117
        %p221 = pneg %p141
        %p222 = pneg %p138
        %p223 = pneg %p167
        %p224 = pneg %p164
        %s225 = sand.u32 %s154, 1
        %s226 = scalar_lea.sflag [#allocation4], %s225
        %s227 = sand.u32 %s154, 1
        %s228 = smul.addr %s227, 64
        %s229 = scalar_lea.vmem [#allocation3], %s228
        %s230 = smul.u32 4, %s20
        %p231 = scmp.eq.s32.totalorder %s20, 0
        // Predicated region
        $region45: #{tpu_custom_call.1} parent=43 // pred_check
          %p232 = pneg %p231
        $region46: #{tpu_custom_call.1} parent=43 // pred_check_branch
          %234 = sbr.rel (%p232) target = $region48
        $region47: #{tpu_custom_call.1} parent=43 // pred_region
          %v235 = vld [vmem:[%s0] sm:$0xff]
          %v236 = vld [vmem:[%s0 + $0x8] sm:$0xff]
          %237 = vst [vmem:[#allocation2] sm:$0xff] %v235
          %238 = vst [vmem:[#allocation2 + $0x8] sm:$0xff] %v236
        $region48: #{tpu_custom_call.1} parent=43 // pred_fallthru
          _
        %v239 = vld [vmem:[%s1] sm:$0xff]
        %v240 = vld [vmem:[%s1 + $0x8] sm:$0xff]
        %vm241 = vcmp.gt.f32.partialorder %v239, 0.5
        %vm242 = vcmp.gt.f32.partialorder %v240, 0.5
        %v243 = vld [vmem:[%s2] sm:$0xff]
        %v244 = vld [vmem:[%s2 + $0x8] sm:$0xff]
        %vm245 = vcmp.gt.f32.partialorder %v243, 0.5
        %vm246 = vcmp.gt.f32.partialorder %v244, 0.5
        %v247 = vld [vmem:[%s3] sm:$0xff]
        %v248 = vld [vmem:[%s3 + $0x8] sm:$0xff]
        %v249 = vld [vmem:[%s3 + $0x10] sm:$0xff]
        %v250 = vld [vmem:[%s3 + $0x18] sm:$0xff]
        %v251 = vld [vmem:[%s3 + $0x20] sm:$0xff]
        %v252 = vld [vmem:[%s3 + $0x28] sm:$0xff]
        %v253 = vld [vmem:[%s3 + $0x30] sm:$0xff]
        %v254 = vld [vmem:[%s3 + $0x38] sm:$0xff]
        %v255 = vld [vmem:[%s5] sm:$0xff]
        %v256 = vld [vmem:[%s4] sm:$0xff]
        %v257 = vld [vmem:[%s4 + $0x8] sm:$0xff]
        %v258 = vld [vmem:[%s4 + $0x10] sm:$0xff]
        %v259 = vld [vmem:[%s4 + $0x18] sm:$0xff]
        %v260 = vld [vmem:[%s4 + $0x20] sm:$0xff]
        %v261 = vld [vmem:[%s4 + $0x28] sm:$0xff]
        %v262 = vld [vmem:[%s4 + $0x30] sm:$0xff]
        %v263 = vld [vmem:[%s4 + $0x38] sm:$0xff]
        %265 = vset.pattern.permute.xlu0 0
        %266 = vperm.xlu0 %265, %v256
        %v267 = vpop.permute.xlu0 %266
        %270 = vset.pattern.permute.xlu0 0
        %271 = vperm.xlu0 %270, %v257
        %v272 = vpop.permute.xlu0 %271
        %275 = vset.pattern.permute.xlu0 0
        %276 = vperm.xlu0 %275, %v258
        %v277 = vpop.permute.xlu0 %276
        %280 = vset.pattern.permute.xlu0 0
        %281 = vperm.xlu0 %280, %v259
        %v282 = vpop.permute.xlu0 %281
        %285 = vset.pattern.permute.xlu0 0
        %286 = vperm.xlu0 %285, %v260
        %v287 = vpop.permute.xlu0 %286
        %290 = vset.pattern.permute.xlu0 0
        %291 = vperm.xlu0 %290, %v261
        %v292 = vpop.permute.xlu0 %291
        %295 = vset.pattern.permute.xlu0 0
        %296 = vperm.xlu0 %295, %v262
        %v297 = vpop.permute.xlu0 %296
        %300 = vset.pattern.permute.xlu0 0
        %301 = vperm.xlu0 %300, %v263
        %v302 = vpop.permute.xlu0 %301
        %v304 = vld [vmem:[#allocation2] sm:$0xff]
        %v305 = vld [vmem:[#allocation2 + $0x8] sm:$0xff]
        %306 = vrot.lane.b32.xlu0 %v304, 15
        %v307 = vpop.permute.xlu0 %306
        %308 = vrot.lane.b32.xlu0 %v305, 15
        %v309 = vpop.permute.xlu0 %308
        %v310 = vlaneseq
        %v311 = vand.u32 %v310, 127
        %vm312 = vcmp.lt.s32.totalorder %v311, 15
        %v313 = vsel %vm312, %v307, %v309
        %v314 = vsel %vm312, %v309, %v307
        %315 = vrot.lane.b32.xlu0 %v304, 127
        %v316 = vpop.permute.xlu0 %315
        %317 = vrot.lane.b32.xlu0 %v305, 127
        %v318 = vpop.permute.xlu0 %317
        %vm319 = vcmp.lt.s32.totalorder %v311, 127
        %v320 = vsel %vm319, %v316, %v318
        %v321 = vsel %vm319, %v318, %v316
        %v322 = vsel %vm241, %v314, %v320
        %v323 = vsel %vm242, %v313, %v321
        %324 = vrot.lane.b32.xlu0 %v304, 113
        %v325 = vpop.permute.xlu0 %324
        %326 = vrot.lane.b32.xlu0 %v305, 113
        %v327 = vpop.permute.xlu0 %326
        %vm328 = vcmp.lt.s32.totalorder %v311, 113
        %v329 = vsel %vm328, %v325, %v327
        %v330 = vsel %vm328, %v327, %v325
        %331 = vrot.lane.b32.xlu0 %v304, 1
        %v332 = vpop.permute.xlu0 %331
        %333 = vrot.lane.b32.xlu0 %v305, 1
        %v334 = vpop.permute.xlu0 %333
        %vm335 = vcmp.lt.s32.totalorder %v311, 1
        %v336 = vsel %vm335, %v332, %v334
        %v337 = vsel %vm335, %v334, %v332
        %v338 = vsel %vm245, %v329, %v337
        %v339 = vsel %vm246, %v330, %v336
        %v340 = vsub.f32 %v322, %v338
        %v341 = vsub.f32 %v323, %v339
        %v342 = vmul.f32 %v304, 2.0
        %v343 = vmul.f32 %v305, 2.0
        %v344 = vadd.f32 %v338, %v342
        %v345 = vadd.f32 %v339, %v343
        %v346 = vadd.f32 %v344, %v322
        %v347 = vadd.f32 %v345, %v323
        %348 = vrot.lane.b32.xlu0 %v340, 16
        %v349 = vpop.permute.xlu0 %348
        %350 = vrot.lane.b32.xlu0 %v341, 16
        %v351 = vpop.permute.xlu0 %350
        %vm352 = vcmp.lt.s32.totalorder %v311, 16
        %v353 = vsel %vm352, %v349, %v351
        %v354 = vsel %vm352, %v351, %v349
        %v355 = vmul.f32 %v340, 2.0
        %v356 = vmul.f32 %v341, 2.0
        %v357 = vadd.f32 %v354, %v355
        %v358 = vadd.f32 %v353, %v356
        %359 = vrot.lane.b32.xlu0 %v340, 112
        %v360 = vpop.permute.xlu0 %359
        %361 = vrot.lane.b32.xlu0 %v341, 112
        %v362 = vpop.permute.xlu0 %361
        %vm363 = vcmp.lt.s32.totalorder %v311, 112
        %v364 = vsel %vm363, %v360, %v362
        %v365 = vsel %vm363, %v362, %v360
        %v366 = vadd.f32 %v357, %v364
        %v367 = vadd.f32 %v358, %v365
        %v368 = vmul.f32 %v366, 0.125
        %v369 = vmul.f32 %v367, 0.125
        %370 = vrot.lane.b32.xlu0 %v346, 112
        %v371 = vpop.permute.xlu0 %370
        %372 = vrot.lane.b32.xlu0 %v347, 112
        %v373 = vpop.permute.xlu0 %372
        %v374 = vsel %vm363, %v371, %v373
        %v375 = vsel %vm363, %v373, %v371
        %376 = vrot.lane.b32.xlu0 %v346, 16
        %v377 = vpop.permute.xlu0 %376
        %378 = vrot.lane.b32.xlu0 %v347, 16
        %v379 = vpop.permute.xlu0 %378
        %v380 = vsel %vm352, %v377, %v379
        %v381 = vsel %vm352, %v379, %v377
        %v382 = vsub.f32 %v374, %v381
        %v383 = vsub.f32 %v375, %v380
        %v384 = vmul.f32 %v382, 0.125
        %v385 = vmul.f32 %v383, 0.125
        %vm386 = vcmask 195584
        %v388 = vsel %vm386, %v247, 0
        %v391 = vsel %vm386, %v248, 0
        %v394 = vsel %vm386, %v249, 0
        %v397 = vsel %vm386, %v250, 0
        %v400 = vsel %vm386, %v251, 0
        %v403 = vsel %vm386, %v252, 0
        %v406 = vsel %vm386, %v253, 0
        %v409 = vsel %vm386, %v254, 0
        %411 = vmatprep.subr.mxu0 %v305
        %412 = vmatpush1.msra.mxu0 %v304
        %413 = vmatprep.subr.mxu0 %v369
        %414 = vmatpush1.msra.mxu0 %v368
        %415 = vmatprep.subr.mxu0 %v385
        %416 = vmatpush1.msra.mxu0 %v384
        %417 = vmatprep.subr.mxu0 0.0
        %418 = vmatpush1.msra.mxu0 0.0
        %419 = vmatprep.subr.mxu0 0.0
        %420 = vmatpush1.msra.mxu0 0.0
        %421 = vmatprep.subr.mxu0 0.0
        %422 = vmatpush1.msra.mxu0 0.0
        %423 = vmatprep.subr.mxu0 0.0
        %424 = vmatpush1.msra.mxu0 0.0
        %425 = vmatprep.subr.mxu0 0.0
        %426 = vmatpush1.msra.mxu0 0.0
        %427 = vmatprep.subr.mxu0 0.0
        %428 = vmatpush1.msra.mxu0 0.0
        %429 = vmatprep.subr.mxu0 0.0
        %430 = vmatpush1.msra.mxu0 0.0
        %431 = vmatprep.subr.mxu0 0.0
        %432 = vmatpush1.msra.mxu0 0.0
        %433 = vmatprep.subr.mxu0 0.0
        %434 = vmatpush1.msra.mxu0 0.0
        %435 = vmatprep.subr.mxu0 0.0
        %436 = vmatpush1.msra.mxu0 0.0
        %437 = vmatprep.subr.mxu0 0.0
        %438 = vmatpush1.msra.mxu0 0.0
        %439 = vmatprep.subr.mxu0 0.0
        %440 = vmatpush1.msra.mxu0 0.0
        %441 = vmatprep.subr.mxu0 0.0
        %442 = vmatpush1.msra.mxu0 0.0
        %443 = vmatprep.subr.mxu0 0.0
        %444 = vmatpush1.msra.mxu0 0.0
        %445 = vmatprep.subr.mxu0 0.0
        %446 = vmatpush1.msra.mxu0 0.0
        %447 = vmatprep.subr.mxu0 0.0
        %448 = vmatpush1.msra.mxu0 0.0
        %449 = vmatprep.subr.mxu0 0.0
        %450 = vmatpush1.msra.mxu0 0.0
        %451 = vmatprep.subr.mxu0 0.0
        %452 = vmatpush1.msra.mxu0 0.0
        %453 = vmatprep.subr.mxu0 0.0
        %454 = vmatpush1.msra.mxu0 0.0
        %455 = vmatprep.subr.mxu0 0.0
        %456 = vmatpush1.msra.mxu0 0.0
        %457 = vmatprep.subr.mxu0 0.0
        %458 = vmatpush1.msra.mxu0 0.0
        %459 = vmatprep.subr.mxu0 0.0
        %460 = vmatpush1.msra.mxu0 0.0
        %461 = vmatprep.subr.mxu0 0.0
        %462 = vmatpush1.msra.mxu0 0.0
        %463 = vmatprep.subr.mxu0 0.0
        %464 = vmatpush1.msra.mxu0 0.0
        %465 = vmatprep.subr.mxu0 0.0
        %466 = vmatpush1.msra.mxu0 0.0
        %467 = vmatprep.subr.mxu0 0.0
        %468 = vmatpush1.msra.mxu0 0.0
        %469 = vmatprep.subr.mxu0 0.0
        %470 = vmatpush1.msra.mxu0 0.0
        %471 = vmatprep.subr.mxu0 0.0
        %472 = vmatpush1.msra.mxu0 0.0
        %473 = vmatprep.subr.mxu0 0.0
        %474 = vmatpush1.msra.mxu0 0.0
        %475 = vmatprep.mubr.f32.mxu0 0.0
        %476 = vmatmul.mubr.f32.gmra.mrb[0].mxu0 %v388
        %v477 = vpop.f32.mrb[0].mxu0
        %v478 = vadd.f32 %v267, %v477
        %v479 = vpop.f32.mrb[0].mxu0
        %v480 = vadd.f32 %v267, %v479
        %481 = vmatprep.mubr.f32.mxu0 0.0
        %482 = vmatmul.mubr.f32.gmra.mrb[0].mxu0 %v391
        %v483 = vpop.f32.mrb[0].mxu0
        %v484 = vadd.f32 %v272, %v483
        %v485 = vpop.f32.mrb[0].mxu0
        %v486 = vadd.f32 %v272, %v485
        %487 = vmatprep.mubr.f32.mxu0 0.0
        %488 = vmatmul.mubr.f32.gmra.mrb[0].mxu0 %v394
        %v489 = vpop.f32.mrb[0].mxu0
        %v490 = vadd.f32 %v277, %v489
        %v491 = vpop.f32.mrb[0].mxu0
        %v492 = vadd.f32 %v277, %v491
        %493 = vmatprep.mubr.f32.mxu0 0.0
        %494 = vmatmul.mubr.f32.gmra.mrb[0].mxu0 %v397
        %v495 = vpop.f32.mrb[0].mxu0
        %v496 = vadd.f32 %v282, %v495
        %v497 = vpop.f32.mrb[0].mxu0
        %v498 = vadd.f32 %v282, %v497
        %499 = vmatprep.mubr.f32.mxu0 0.0
        %500 = vmatmul.mubr.f32.gmra.mrb[0].mxu0 %v400
        %v501 = vpop.f32.mrb[0].mxu0
        %v502 = vadd.f32 %v287, %v501
        %v503 = vpop.f32.mrb[0].mxu0
        %v504 = vadd.f32 %v287, %v503
        %505 = vmatprep.mubr.f32.mxu0 0.0
        %506 = vmatmul.mubr.f32.gmra.mrb[0].mxu0 %v403
        %v507 = vpop.f32.mrb[0].mxu0
        %v508 = vadd.f32 %v292, %v507
        %v509 = vpop.f32.mrb[0].mxu0
        %v510 = vadd.f32 %v292, %v509
        %511 = vmatprep.mubr.f32.mxu0 0.0
        %512 = vmatmul.mubr.f32.gmra.mrb[0].mxu0 %v406
        %v513 = vpop.f32.mrb[0].mxu0
        %v514 = vadd.f32 %v297, %v513
        %v515 = vpop.f32.mrb[0].mxu0
        %v516 = vadd.f32 %v297, %v515
        %517 = vmatprep.mubr.f32.mxu0 0.0
        %518 = vmatmul.mubr.f32.gmra.mrb[0].mxu0 %v409
        %v519 = vpop.f32.mrb[0].mxu0
        %v520 = vadd.f32 %v302, %v519
        %v521 = vpop.f32.mrb[0].mxu0
        %v522 = vadd.f32 %v302, %v521
        %523 = vdwg.mxu0
        %v524 = vmax.f32 %v478, 0.0
        %v525 = vmax.f32 %v480, 0.0
        %v526 = vmax.f32 %v484, 0.0
        %v527 = vmax.f32 %v486, 0.0
        %v528 = vmax.f32 %v490, 0.0
        %v529 = vmax.f32 %v492, 0.0
        %v530 = vmax.f32 %v496, 0.0
        %v531 = vmax.f32 %v498, 0.0
        %v532 = vmax.f32 %v502, 0.0
        %v533 = vmax.f32 %v504, 0.0
        %v534 = vmax.f32 %v508, 0.0
        %v535 = vmax.f32 %v510, 0.0
        %v536 = vmax.f32 %v514, 0.0
        %v537 = vmax.f32 %v516, 0.0
        %v538 = vmax.f32 %v520, 0.0
        %v539 = vmax.f32 %v522, 0.0
        %vm540 = vcmask 523264
        %v542 = vsel %vm540, %v255, 0
        %544 = vmatprep.subr.mxu0 %v525
        %545 = vmatpush1.msra.mxu0 %v524
        %546 = vmatprep.subr.mxu0 %v527
        %547 = vmatpush1.msra.mxu0 %v526
        %548 = vmatprep.subr.mxu0 %v529
        %549 = vmatpush1.msra.mxu0 %v528
        %550 = vmatprep.subr.mxu0 %v531
        %551 = vmatpush1.msra.mxu0 %v530
        %552 = vmatprep.subr.mxu0 %v533
        %553 = vmatpush1.msra.mxu0 %v532
        %554 = vmatprep.subr.mxu0 %v535
        %555 = vmatpush1.msra.mxu0 %v534
        %556 = vmatprep.subr.mxu0 %v537
        %557 = vmatpush1.msra.mxu0 %v536
        %558 = vmatprep.subr.mxu0 %v539
        %559 = vmatpush1.msra.mxu0 %v538
        %560 = vmatprep.subr.mxu0 0.0
        %561 = vmatpush1.msra.mxu0 0.0
        %562 = vmatprep.subr.mxu0 0.0
        %563 = vmatpush1.msra.mxu0 0.0
        %564 = vmatprep.subr.mxu0 0.0
        %565 = vmatpush1.msra.mxu0 0.0
        %566 = vmatprep.subr.mxu0 0.0
        %567 = vmatpush1.msra.mxu0 0.0
        %568 = vmatprep.subr.mxu0 0.0
        %569 = vmatpush1.msra.mxu0 0.0
        %570 = vmatprep.subr.mxu0 0.0
        %571 = vmatpush1.msra.mxu0 0.0
        %572 = vmatprep.subr.mxu0 0.0
        %573 = vmatpush1.msra.mxu0 0.0
        %574 = vmatprep.subr.mxu0 0.0
        %575 = vmatpush1.msra.mxu0 0.0
        %576 = vmatprep.subr.mxu0 0.0
        %577 = vmatpush1.msra.mxu0 0.0
        %578 = vmatprep.subr.mxu0 0.0
        %579 = vmatpush1.msra.mxu0 0.0
        %580 = vmatprep.subr.mxu0 0.0
        %581 = vmatpush1.msra.mxu0 0.0
        %582 = vmatprep.subr.mxu0 0.0
        %583 = vmatpush1.msra.mxu0 0.0
        %584 = vmatprep.subr.mxu0 0.0
        %585 = vmatpush1.msra.mxu0 0.0
        %586 = vmatprep.subr.mxu0 0.0
        %587 = vmatpush1.msra.mxu0 0.0
        %588 = vmatprep.subr.mxu0 0.0
        %589 = vmatpush1.msra.mxu0 0.0
        %590 = vmatprep.subr.mxu0 0.0
        %591 = vmatpush1.msra.mxu0 0.0
        %592 = vmatprep.subr.mxu0 0.0
        %593 = vmatpush1.msra.mxu0 0.0
        %594 = vmatprep.subr.mxu0 0.0
        %595 = vmatpush1.msra.mxu0 0.0
        %596 = vmatprep.subr.mxu0 0.0
        %597 = vmatpush1.msra.mxu0 0.0
        %598 = vmatprep.subr.mxu0 0.0
        %599 = vmatpush1.msra.mxu0 0.0
        %600 = vmatprep.subr.mxu0 0.0
        %601 = vmatpush1.msra.mxu0 0.0
        %602 = vmatprep.subr.mxu0 0.0
        %603 = vmatpush1.msra.mxu0 0.0
        %604 = vmatprep.subr.mxu0 0.0
        %605 = vmatpush1.msra.mxu0 0.0
        %606 = vmatprep.subr.mxu0 0.0
        %607 = vmatpush1.msra.mxu0 0.0
        %608 = vmatprep.mubr.f32.mxu0 0.0
        %609 = vmatmul.mubr.f32.gmra.mrb[0].mxu0 %v542
        %v610 = vpop.f32.mrb[0].mxu0
        %v611 = vadd.f32 0.0, %v610
        %v612 = vpop.f32.mrb[0].mxu0
        %v613 = vadd.f32 0.0, %v612
        %614 = vdwg.mxu0
        %v615 = vadd.f32 %v304, %v611
        %v616 = vadd.f32 %v305, %v613
        %617 = vst [vmem:[%s229] sm:$0xff] %v615
        %618 = vst [vmem:[%s229 + $0x8] sm:$0xff] %v616
        %619 = vrot.lane.b32.xlu0 %v615, 15
        %v620 = vpop.permute.xlu0 %619
        %621 = vrot.lane.b32.xlu0 %v616, 15
        %v622 = vpop.permute.xlu0 %621
        %v623 = vsel %vm312, %v620, %v622
        %v624 = vsel %vm312, %v622, %v620
        %625 = vrot.lane.b32.xlu0 %v615, 127
        %v626 = vpop.permute.xlu0 %625
        %627 = vrot.lane.b32.xlu0 %v616, 127
        %v628 = vpop.permute.xlu0 %627
        %v629 = vsel %vm319, %v626, %v628
        %v630 = vsel %vm319, %v628, %v626
        %v631 = vsel %vm241, %v624, %v629
        %v632 = vsel %vm242, %v623, %v630
        %633 = vrot.lane.b32.xlu0 %v615, 113
        %v634 = vpop.permute.xlu0 %633
        %635 = vrot.lane.b32.xlu0 %v616, 113
        %v636 = vpop.permute.xlu0 %635
        %v637 = vsel %vm328, %v634, %v636
        %v638 = vsel %vm328, %v636, %v634
        %639 = vrot.lane.b32.xlu0 %v615, 1
        %v640 = vpop.permute.xlu0 %639
        %641 = vrot.lane.b32.xlu0 %v616, 1
        %v642 = vpop.permute.xlu0 %641
        %v643 = vsel %vm335, %v640, %v642
        %v644 = vsel %vm335, %v642, %v640
        %v645 = vsel %vm245, %v637, %v644
        %v646 = vsel %vm246, %v638, %v643
        %v647 = vsub.f32 %v631, %v645
        %v648 = vsub.f32 %v632, %v646
        %v649 = vmul.f32 %v615, 2.0
        %v650 = vmul.f32 %v616, 2.0
        %v651 = vadd.f32 %v645, %v649
        %v652 = vadd.f32 %v646, %v650
        %v653 = vadd.f32 %v651, %v631
        %v654 = vadd.f32 %v652, %v632
        %655 = vrot.lane.b32.xlu0 %v647, 16
        %v656 = vpop.permute.xlu0 %655
        %657 = vrot.lane.b32.xlu0 %v648, 16
        %v658 = vpop.permute.xlu0 %657
        %v659 = vsel %vm352, %v656, %v658
        %v660 = vsel %vm352, %v658, %v656
        %v661 = vmul.f32 %v647, 2.0
        %v662 = vmul.f32 %v648, 2.0
        %v663 = vadd.f32 %v660, %v661
        %v664 = vadd.f32 %v659, %v662
        %665 = vrot.lane.b32.xlu0 %v647, 112
        %v666 = vpop.permute.xlu0 %665
        %667 = vrot.lane.b32.xlu0 %v648, 112
        %v668 = vpop.permute.xlu0 %667
        %v669 = vsel %vm363, %v666, %v668
        %v670 = vsel %vm363, %v668, %v666
        %v671 = vadd.f32 %v663, %v669
        %v672 = vadd.f32 %v664, %v670
        %v673 = vmul.f32 %v671, 0.125
        %v674 = vmul.f32 %v672, 0.125
        %675 = vrot.lane.b32.xlu0 %v653, 112
        %v676 = vpop.permute.xlu0 %675
        %677 = vrot.lane.b32.xlu0 %v654, 112
        %v678 = vpop.permute.xlu0 %677
        %v679 = vsel %vm363, %v676, %v678
        %v680 = vsel %vm363, %v678, %v676
        %681 = vrot.lane.b32.xlu0 %v653, 16
        %v682 = vpop.permute.xlu0 %681
        %683 = vrot.lane.b32.xlu0 %v654, 16
        %v684 = vpop.permute.xlu0 %683
        %v685 = vsel %vm352, %v682, %v684
        %v686 = vsel %vm352, %v684, %v682
        %v687 = vsub.f32 %v679, %v686
        %v688 = vsub.f32 %v680, %v685
        %v689 = vmul.f32 %v687, 0.125
        %v690 = vmul.f32 %v688, 0.125
        %691 = vmatprep.subr.mxu0 %v616
        %692 = vmatpush1.msra.mxu0 %v615
        %693 = vmatprep.subr.mxu0 %v674
        %694 = vmatpush1.msra.mxu0 %v673
        %695 = vmatprep.subr.mxu0 %v690
        %696 = vmatpush1.msra.mxu0 %v689
        %697 = vmatprep.subr.mxu0 0.0
        %698 = vmatpush1.msra.mxu0 0.0
        %699 = vmatprep.subr.mxu0 0.0
        %700 = vmatpush1.msra.mxu0 0.0
        %701 = vmatprep.subr.mxu0 0.0
        %702 = vmatpush1.msra.mxu0 0.0
        %703 = vmatprep.subr.mxu0 0.0
        %704 = vmatpush1.msra.mxu0 0.0
        %705 = vmatprep.subr.mxu0 0.0
        %706 = vmatpush1.msra.mxu0 0.0
        %707 = vmatprep.subr.mxu0 0.0
        %708 = vmatpush1.msra.mxu0 0.0
        %709 = vmatprep.subr.mxu0 0.0
        %710 = vmatpush1.msra.mxu0 0.0
        %711 = vmatprep.subr.mxu0 0.0
        %712 = vmatpush1.msra.mxu0 0.0
        %713 = vmatprep.subr.mxu0 0.0
        %714 = vmatpush1.msra.mxu0 0.0
        %715 = vmatprep.subr.mxu0 0.0
        %716 = vmatpush1.msra.mxu0 0.0
        %717 = vmatprep.subr.mxu0 0.0
        %718 = vmatpush1.msra.mxu0 0.0
        %719 = vmatprep.subr.mxu0 0.0
        %720 = vmatpush1.msra.mxu0 0.0
        %721 = vmatprep.subr.mxu0 0.0
        %722 = vmatpush1.msra.mxu0 0.0
        %723 = vmatprep.subr.mxu0 0.0
        %724 = vmatpush1.msra.mxu0 0.0
        %725 = vmatprep.subr.mxu0 0.0
        %726 = vmatpush1.msra.mxu0 0.0
        %727 = vmatprep.subr.mxu0 0.0
        %728 = vmatpush1.msra.mxu0 0.0
        %729 = vmatprep.subr.mxu0 0.0
        %730 = vmatpush1.msra.mxu0 0.0
        %731 = vmatprep.subr.mxu0 0.0
        %732 = vmatpush1.msra.mxu0 0.0
        %733 = vmatprep.subr.mxu0 0.0
        %734 = vmatpush1.msra.mxu0 0.0
        %735 = vmatprep.subr.mxu0 0.0
        %736 = vmatpush1.msra.mxu0 0.0
        %737 = vmatprep.subr.mxu0 0.0
        %738 = vmatpush1.msra.mxu0 0.0
        %739 = vmatprep.subr.mxu0 0.0
        %740 = vmatpush1.msra.mxu0 0.0
        %741 = vmatprep.subr.mxu0 0.0
        %742 = vmatpush1.msra.mxu0 0.0
        %743 = vmatprep.subr.mxu0 0.0
        %744 = vmatpush1.msra.mxu0 0.0
        %745 = vmatprep.subr.mxu0 0.0
        %746 = vmatpush1.msra.mxu0 0.0
        %747 = vmatprep.subr.mxu0 0.0
        %748 = vmatpush1.msra.mxu0 0.0
        %749 = vmatprep.subr.mxu0 0.0
        %750 = vmatpush1.msra.mxu0 0.0
        %751 = vmatprep.subr.mxu0 0.0
        %752 = vmatpush1.msra.mxu0 0.0
        %753 = vmatprep.subr.mxu0 0.0
        %754 = vmatpush1.msra.mxu0 0.0
        %755 = vmatprep.mubr.f32.mxu0 0.0
        %756 = vmatmul.mubr.f32.gmra.mrb[0].mxu0 %v388
        %v757 = vpop.f32.mrb[0].mxu0
        %v758 = vadd.f32 %v267, %v757
        %v759 = vpop.f32.mrb[0].mxu0
        %v760 = vadd.f32 %v267, %v759
        %761 = vmatprep.mubr.f32.mxu0 0.0
        %762 = vmatmul.mubr.f32.gmra.mrb[0].mxu0 %v391
        %v763 = vpop.f32.mrb[0].mxu0
        %v764 = vadd.f32 %v272, %v763
        %v765 = vpop.f32.mrb[0].mxu0
        %v766 = vadd.f32 %v272, %v765
        %767 = vmatprep.mubr.f32.mxu0 0.0
        %768 = vmatmul.mubr.f32.gmra.mrb[0].mxu0 %v394
        %v769 = vpop.f32.mrb[0].mxu0
        %v770 = vadd.f32 %v277, %v769
        %v771 = vpop.f32.mrb[0].mxu0
        %v772 = vadd.f32 %v277, %v771
        %773 = vmatprep.mubr.f32.mxu0 0.0
        %774 = vmatmul.mubr.f32.gmra.mrb[0].mxu0 %v397
        %v775 = vpop.f32.mrb[0].mxu0
        %v776 = vadd.f32 %v282, %v775
        %v777 = vpop.f32.mrb[0].mxu0
        %v778 = vadd.f32 %v282, %v777
        %779 = vmatprep.mubr.f32.mxu0 0.0
        %780 = vmatmul.mubr.f32.gmra.mrb[0].mxu0 %v400
        %v781 = vpop.f32.mrb[0].mxu0
        %v782 = vadd.f32 %v287, %v781
        %v783 = vpop.f32.mrb[0].mxu0
        %v784 = vadd.f32 %v287, %v783
        %785 = vmatprep.mubr.f32.mxu0 0.0
        %786 = vmatmul.mubr.f32.gmra.mrb[0].mxu0 %v403
        %v787 = vpop.f32.mrb[0].mxu0
        %v788 = vadd.f32 %v292, %v787
        %v789 = vpop.f32.mrb[0].mxu0
        %v790 = vadd.f32 %v292, %v789
        %791 = vmatprep.mubr.f32.mxu0 0.0
        %792 = vmatmul.mubr.f32.gmra.mrb[0].mxu0 %v406
        %v793 = vpop.f32.mrb[0].mxu0
        %v794 = vadd.f32 %v297, %v793
        %v795 = vpop.f32.mrb[0].mxu0
        %v796 = vadd.f32 %v297, %v795
        %797 = vmatprep.mubr.f32.mxu0 0.0
        %798 = vmatmul.mubr.f32.gmra.mrb[0].mxu0 %v409
        %v799 = vpop.f32.mrb[0].mxu0
        %v800 = vadd.f32 %v302, %v799
        %v801 = vpop.f32.mrb[0].mxu0
        %v802 = vadd.f32 %v302, %v801
        %803 = vdwg.mxu0
        %v804 = vmax.f32 %v758, 0.0
        %v805 = vmax.f32 %v760, 0.0
        %v806 = vmax.f32 %v764, 0.0
        %v807 = vmax.f32 %v766, 0.0
        %v808 = vmax.f32 %v770, 0.0
        %v809 = vmax.f32 %v772, 0.0
        %v810 = vmax.f32 %v776, 0.0
        %v811 = vmax.f32 %v778, 0.0
        %v812 = vmax.f32 %v782, 0.0
        %v813 = vmax.f32 %v784, 0.0
        %v814 = vmax.f32 %v788, 0.0
        %v815 = vmax.f32 %v790, 0.0
        %v816 = vmax.f32 %v794, 0.0
        %v817 = vmax.f32 %v796, 0.0
        %v818 = vmax.f32 %v800, 0.0
        %v819 = vmax.f32 %v802, 0.0
        %820 = vmatprep.subr.mxu0 %v805
        %821 = vmatpush1.msra.mxu0 %v804
        %822 = vmatprep.subr.mxu0 %v807
        %823 = vmatpush1.msra.mxu0 %v806
        %824 = vmatprep.subr.mxu0 %v809
        %825 = vmatpush1.msra.mxu0 %v808
        %826 = vmatprep.subr.mxu0 %v811
        %827 = vmatpush1.msra.mxu0 %v810
        %828 = vmatprep.subr.mxu0 %v813
        %829 = vmatpush1.msra.mxu0 %v812
        %830 = vmatprep.subr.mxu0 %v815
        %831 = vmatpush1.msra.mxu0 %v814
        %832 = vmatprep.subr.mxu0 %v817
        %833 = vmatpush1.msra.mxu0 %v816
        %834 = vmatprep.subr.mxu0 %v819
        %835 = vmatpush1.msra.mxu0 %v818
        %836 = vmatprep.subr.mxu0 0.0
        %837 = vmatpush1.msra.mxu0 0.0
        %838 = vmatprep.subr.mxu0 0.0
        %839 = vmatpush1.msra.mxu0 0.0
        %840 = vmatprep.subr.mxu0 0.0
        %841 = vmatpush1.msra.mxu0 0.0
        %842 = vmatprep.subr.mxu0 0.0
        %843 = vmatpush1.msra.mxu0 0.0
        %844 = vmatprep.subr.mxu0 0.0
        %845 = vmatpush1.msra.mxu0 0.0
        %846 = vmatprep.subr.mxu0 0.0
        %847 = vmatpush1.msra.mxu0 0.0
        %848 = vmatprep.subr.mxu0 0.0
        %849 = vmatpush1.msra.mxu0 0.0
        %850 = vmatprep.subr.mxu0 0.0
        %851 = vmatpush1.msra.mxu0 0.0
        %852 = vmatprep.subr.mxu0 0.0
        %853 = vmatpush1.msra.mxu0 0.0
        %854 = vmatprep.subr.mxu0 0.0
        %855 = vmatpush1.msra.mxu0 0.0
        %856 = vmatprep.subr.mxu0 0.0
        %857 = vmatpush1.msra.mxu0 0.0
        %858 = vmatprep.subr.mxu0 0.0
        %859 = vmatpush1.msra.mxu0 0.0
        %860 = vmatprep.subr.mxu0 0.0
        %861 = vmatpush1.msra.mxu0 0.0
        %862 = vmatprep.subr.mxu0 0.0
        %863 = vmatpush1.msra.mxu0 0.0
        %864 = vmatprep.subr.mxu0 0.0
        %865 = vmatpush1.msra.mxu0 0.0
        %866 = vmatprep.subr.mxu0 0.0
        %867 = vmatpush1.msra.mxu0 0.0
        %868 = vmatprep.subr.mxu0 0.0
        %869 = vmatpush1.msra.mxu0 0.0
        %870 = vmatprep.subr.mxu0 0.0
        %871 = vmatpush1.msra.mxu0 0.0
        %872 = vmatprep.subr.mxu0 0.0
        %873 = vmatpush1.msra.mxu0 0.0
        %874 = vmatprep.subr.mxu0 0.0
        %875 = vmatpush1.msra.mxu0 0.0
        %876 = vmatprep.subr.mxu0 0.0
        %877 = vmatpush1.msra.mxu0 0.0
        %878 = vmatprep.subr.mxu0 0.0
        %879 = vmatpush1.msra.mxu0 0.0
        %880 = vmatprep.subr.mxu0 0.0
        %881 = vmatpush1.msra.mxu0 0.0
        %882 = vmatprep.subr.mxu0 0.0
        %883 = vmatpush1.msra.mxu0 0.0
        %884 = vmatprep.mubr.f32.mxu0 0.0
        %885 = vmatmul.mubr.f32.gmra.mrb[0].mxu0 %v542
        %v886 = vpop.f32.mrb[0].mxu0
        %v887 = vadd.f32 0.0, %v886
        %v888 = vpop.f32.mrb[0].mxu0
        %v889 = vadd.f32 0.0, %v888
        %890 = vdwg.mxu0
        %v891 = vadd.f32 %v615, %v887
        %v892 = vadd.f32 %v616, %v889
        %s893 = scalar_lea.vmem %s229, 16 [#allocation3]
        %894 = vst [vmem:[%s893] sm:$0xff] %v891
        %895 = vst [vmem:[%s893 + $0x8] sm:$0xff] %v892
        %896 = vrot.lane.b32.xlu0 %v891, 15
        %v897 = vpop.permute.xlu0 %896
        %898 = vrot.lane.b32.xlu0 %v892, 15
        %v899 = vpop.permute.xlu0 %898
        %v900 = vsel %vm312, %v897, %v899
        %v901 = vsel %vm312, %v899, %v897
        %902 = vrot.lane.b32.xlu0 %v891, 127
        %v903 = vpop.permute.xlu0 %902
        %904 = vrot.lane.b32.xlu0 %v892, 127
        %v905 = vpop.permute.xlu0 %904
        %v906 = vsel %vm319, %v903, %v905
        %v907 = vsel %vm319, %v905, %v903
        %v908 = vsel %vm241, %v901, %v906
        %v909 = vsel %vm242, %v900, %v907
        %910 = vrot.lane.b32.xlu0 %v891, 113
        %v911 = vpop.permute.xlu0 %910
        %912 = vrot.lane.b32.xlu0 %v892, 113
        %v913 = vpop.permute.xlu0 %912
        %v914 = vsel %vm328, %v911, %v913
        %v915 = vsel %vm328, %v913, %v911
        %916 = vrot.lane.b32.xlu0 %v891, 1
        %v917 = vpop.permute.xlu0 %916
        %918 = vrot.lane.b32.xlu0 %v892, 1
        %v919 = vpop.permute.xlu0 %918
        %v920 = vsel %vm335, %v917, %v919
        %v921 = vsel %vm335, %v919, %v917
        %v922 = vsel %vm245, %v914, %v921
        %v923 = vsel %vm246, %v915, %v920
        %v924 = vsub.f32 %v908, %v922
        %v925 = vsub.f32 %v909, %v923
        %v926 = vmul.f32 %v891, 2.0
        %v927 = vmul.f32 %v892, 2.0
        %v928 = vadd.f32 %v922, %v926
        %v929 = vadd.f32 %v923, %v927
        %v930 = vadd.f32 %v928, %v908
        %v931 = vadd.f32 %v929, %v909
        %932 = vrot.lane.b32.xlu0 %v924, 16
        %v933 = vpop.permute.xlu0 %932
        %934 = vrot.lane.b32.xlu0 %v925, 16
        %v935 = vpop.permute.xlu0 %934
        %v936 = vsel %vm352, %v933, %v935
        %v937 = vsel %vm352, %v935, %v933
        %v938 = vmul.f32 %v924, 2.0
        %v939 = vmul.f32 %v925, 2.0
        %v940 = vadd.f32 %v937, %v938
        %v941 = vadd.f32 %v936, %v939
        %942 = vrot.lane.b32.xlu0 %v924, 112
        %v943 = vpop.permute.xlu0 %942
        %944 = vrot.lane.b32.xlu0 %v925, 112
        %v945 = vpop.permute.xlu0 %944
        %v946 = vsel %vm363, %v943, %v945
        %v947 = vsel %vm363, %v945, %v943
        %v948 = vadd.f32 %v940, %v946
        %v949 = vadd.f32 %v941, %v947
        %v950 = vmul.f32 %v948, 0.125
        %v951 = vmul.f32 %v949, 0.125
        %952 = vrot.lane.b32.xlu0 %v930, 112
        %v953 = vpop.permute.xlu0 %952
        %954 = vrot.lane.b32.xlu0 %v931, 112
        %v955 = vpop.permute.xlu0 %954
        %v956 = vsel %vm363, %v953, %v955
        %v957 = vsel %vm363, %v955, %v953
        %958 = vrot.lane.b32.xlu0 %v930, 16
        %v959 = vpop.permute.xlu0 %958
        %960 = vrot.lane.b32.xlu0 %v931, 16
        %v961 = vpop.permute.xlu0 %960
        %v962 = vsel %vm352, %v959, %v961
        %v963 = vsel %vm352, %v961, %v959
        %v964 = vsub.f32 %v956, %v963
        %v965 = vsub.f32 %v957, %v962
        %v966 = vmul.f32 %v964, 0.125
        %v967 = vmul.f32 %v965, 0.125
        %968 = vmatprep.subr.mxu0 %v892
        %969 = vmatpush1.msra.mxu0 %v891
        %970 = vmatprep.subr.mxu0 %v951
        %971 = vmatpush1.msra.mxu0 %v950
        %972 = vmatprep.subr.mxu0 %v967
        %973 = vmatpush1.msra.mxu0 %v966
        %974 = vmatprep.subr.mxu0 0.0
        %975 = vmatpush1.msra.mxu0 0.0
        %976 = vmatprep.subr.mxu0 0.0
        %977 = vmatpush1.msra.mxu0 0.0
        %978 = vmatprep.subr.mxu0 0.0
        %979 = vmatpush1.msra.mxu0 0.0
        %980 = vmatprep.subr.mxu0 0.0
        %981 = vmatpush1.msra.mxu0 0.0
        %982 = vmatprep.subr.mxu0 0.0
        %983 = vmatpush1.msra.mxu0 0.0
        %984 = vmatprep.subr.mxu0 0.0
        %985 = vmatpush1.msra.mxu0 0.0
        %986 = vmatprep.subr.mxu0 0.0
        %987 = vmatpush1.msra.mxu0 0.0
        %988 = vmatprep.subr.mxu0 0.0
        %989 = vmatpush1.msra.mxu0 0.0
        %990 = vmatprep.subr.mxu0 0.0
        %991 = vmatpush1.msra.mxu0 0.0
        %992 = vmatprep.subr.mxu0 0.0
        %993 = vmatpush1.msra.mxu0 0.0
        %994 = vmatprep.subr.mxu0 0.0
        %995 = vmatpush1.msra.mxu0 0.0
        %996 = vmatprep.subr.mxu0 0.0
        %997 = vmatpush1.msra.mxu0 0.0
        %998 = vmatprep.subr.mxu0 0.0
        %999 = vmatpush1.msra.mxu0 0.0
        %1000 = vmatprep.subr.mxu0 0.0
        %1001 = vmatpush1.msra.mxu0 0.0
        %1002 = vmatprep.subr.mxu0 0.0
        %1003 = vmatpush1.msra.mxu0 0.0
        %1004 = vmatprep.subr.mxu0 0.0
        %1005 = vmatpush1.msra.mxu0 0.0
        %1006 = vmatprep.subr.mxu0 0.0
        %1007 = vmatpush1.msra.mxu0 0.0
        %1008 = vmatprep.subr.mxu0 0.0
        %1009 = vmatpush1.msra.mxu0 0.0
        %1010 = vmatprep.subr.mxu0 0.0
        %1011 = vmatpush1.msra.mxu0 0.0
        %1012 = vmatprep.subr.mxu0 0.0
        %1013 = vmatpush1.msra.mxu0 0.0
        %1014 = vmatprep.subr.mxu0 0.0
        %1015 = vmatpush1.msra.mxu0 0.0
        %1016 = vmatprep.subr.mxu0 0.0
        %1017 = vmatpush1.msra.mxu0 0.0
        %1018 = vmatprep.subr.mxu0 0.0
        %1019 = vmatpush1.msra.mxu0 0.0
        %1020 = vmatprep.subr.mxu0 0.0
        %1021 = vmatpush1.msra.mxu0 0.0
        %1022 = vmatprep.subr.mxu0 0.0
        %1023 = vmatpush1.msra.mxu0 0.0
        %1024 = vmatprep.subr.mxu0 0.0
        %1025 = vmatpush1.msra.mxu0 0.0
        %1026 = vmatprep.subr.mxu0 0.0
        %1027 = vmatpush1.msra.mxu0 0.0
        %1028 = vmatprep.subr.mxu0 0.0
        %1029 = vmatpush1.msra.mxu0 0.0
        %1030 = vmatprep.subr.mxu0 0.0
        %1031 = vmatpush1.msra.mxu0 0.0
        %1032 = vmatprep.mubr.f32.mxu0 0.0
        %1033 = vmatmul.mubr.f32.gmra.mrb[0].mxu0 %v388
        %v1034 = vpop.f32.mrb[0].mxu0
        %v1035 = vadd.f32 %v267, %v1034
        %v1036 = vpop.f32.mrb[0].mxu0
        %v1037 = vadd.f32 %v267, %v1036
        %1038 = vmatprep.mubr.f32.mxu0 0.0
        %1039 = vmatmul.mubr.f32.gmra.mrb[0].mxu0 %v391
        %v1040 = vpop.f32.mrb[0].mxu0
        %v1041 = vadd.f32 %v272, %v1040
        %v1042 = vpop.f32.mrb[0].mxu0
        %v1043 = vadd.f32 %v272, %v1042
        %1044 = vmatprep.mubr.f32.mxu0 0.0
        %1045 = vmatmul.mubr.f32.gmra.mrb[0].mxu0 %v394
        %v1046 = vpop.f32.mrb[0].mxu0
        %v1047 = vadd.f32 %v277, %v1046
        %v1048 = vpop.f32.mrb[0].mxu0
        %v1049 = vadd.f32 %v277, %v1048
        %1050 = vmatprep.mubr.f32.mxu0 0.0
        %1051 = vmatmul.mubr.f32.gmra.mrb[0].mxu0 %v397
        %v1052 = vpop.f32.mrb[0].mxu0
        %v1053 = vadd.f32 %v282, %v1052
        %v1054 = vpop.f32.mrb[0].mxu0
        %v1055 = vadd.f32 %v282, %v1054
        %1056 = vmatprep.mubr.f32.mxu0 0.0
        %1057 = vmatmul.mubr.f32.gmra.mrb[0].mxu0 %v400
        %v1058 = vpop.f32.mrb[0].mxu0
        %v1059 = vadd.f32 %v287, %v1058
        %v1060 = vpop.f32.mrb[0].mxu0
        %v1061 = vadd.f32 %v287, %v1060
        %1062 = vmatprep.mubr.f32.mxu0 0.0
        %1063 = vmatmul.mubr.f32.gmra.mrb[0].mxu0 %v403
        %v1064 = vpop.f32.mrb[0].mxu0
        %v1065 = vadd.f32 %v292, %v1064
        %v1066 = vpop.f32.mrb[0].mxu0
        %v1067 = vadd.f32 %v292, %v1066
        %1068 = vmatprep.mubr.f32.mxu0 0.0
        %1069 = vmatmul.mubr.f32.gmra.mrb[0].mxu0 %v406
        %v1070 = vpop.f32.mrb[0].mxu0
        %v1071 = vadd.f32 %v297, %v1070
        %v1072 = vpop.f32.mrb[0].mxu0
        %v1073 = vadd.f32 %v297, %v1072
        %1074 = vmatprep.mubr.f32.mxu0 0.0
        %1075 = vmatmul.mubr.f32.gmra.mrb[0].mxu0 %v409
        %v1076 = vpop.f32.mrb[0].mxu0
        %v1077 = vadd.f32 %v302, %v1076
        %v1078 = vpop.f32.mrb[0].mxu0
        %v1079 = vadd.f32 %v302, %v1078
        %1080 = vdwg.mxu0
        %v1081 = vmax.f32 %v1035, 0.0
        %v1082 = vmax.f32 %v1037, 0.0
        %v1083 = vmax.f32 %v1041, 0.0
        %v1084 = vmax.f32 %v1043, 0.0
        %v1085 = vmax.f32 %v1047, 0.0
        %v1086 = vmax.f32 %v1049, 0.0
        %v1087 = vmax.f32 %v1053, 0.0
        %v1088 = vmax.f32 %v1055, 0.0
        %v1089 = vmax.f32 %v1059, 0.0
        %v1090 = vmax.f32 %v1061, 0.0
        %v1091 = vmax.f32 %v1065, 0.0
        %v1092 = vmax.f32 %v1067, 0.0
        %v1093 = vmax.f32 %v1071, 0.0
        %v1094 = vmax.f32 %v1073, 0.0
        %v1095 = vmax.f32 %v1077, 0.0
        %v1096 = vmax.f32 %v1079, 0.0
        %1097 = vmatprep.subr.mxu0 %v1082
        %1098 = vmatpush1.msra.mxu0 %v1081
        %1099 = vmatprep.subr.mxu0 %v1084
        %1100 = vmatpush1.msra.mxu0 %v1083
        %1101 = vmatprep.subr.mxu0 %v1086
        %1102 = vmatpush1.msra.mxu0 %v1085
        %1103 = vmatprep.subr.mxu0 %v1088
        %1104 = vmatpush1.msra.mxu0 %v1087
        %1105 = vmatprep.subr.mxu0 %v1090
        %1106 = vmatpush1.msra.mxu0 %v1089
        %1107 = vmatprep.subr.mxu0 %v1092
        %1108 = vmatpush1.msra.mxu0 %v1091
        %1109 = vmatprep.subr.mxu0 %v1094
        %1110 = vmatpush1.msra.mxu0 %v1093
        %1111 = vmatprep.subr.mxu0 %v1096
        %1112 = vmatpush1.msra.mxu0 %v1095
        %1113 = vmatprep.subr.mxu0 0.0
        %1114 = vmatpush1.msra.mxu0 0.0
        %1115 = vmatprep.subr.mxu0 0.0
        %1116 = vmatpush1.msra.mxu0 0.0
        %1117 = vmatprep.subr.mxu0 0.0
        %1118 = vmatpush1.msra.mxu0 0.0
        %1119 = vmatprep.subr.mxu0 0.0
        %1120 = vmatpush1.msra.mxu0 0.0
        %1121 = vmatprep.subr.mxu0 0.0
        %1122 = vmatpush1.msra.mxu0 0.0
        %1123 = vmatprep.subr.mxu0 0.0
        %1124 = vmatpush1.msra.mxu0 0.0
        %1125 = vmatprep.subr.mxu0 0.0
        %1126 = vmatpush1.msra.mxu0 0.0
        %1127 = vmatprep.subr.mxu0 0.0
        %1128 = vmatpush1.msra.mxu0 0.0
        %1129 = vmatprep.subr.mxu0 0.0
        %1130 = vmatpush1.msra.mxu0 0.0
        %1131 = vmatprep.subr.mxu0 0.0
        %1132 = vmatpush1.msra.mxu0 0.0
        %1133 = vmatprep.subr.mxu0 0.0
        %1134 = vmatpush1.msra.mxu0 0.0
        %1135 = vmatprep.subr.mxu0 0.0
        %1136 = vmatpush1.msra.mxu0 0.0
        %1137 = vmatprep.subr.mxu0 0.0
        %1138 = vmatpush1.msra.mxu0 0.0
        %1139 = vmatprep.subr.mxu0 0.0
        %1140 = vmatpush1.msra.mxu0 0.0
        %1141 = vmatprep.subr.mxu0 0.0
        %1142 = vmatpush1.msra.mxu0 0.0
        %1143 = vmatprep.subr.mxu0 0.0
        %1144 = vmatpush1.msra.mxu0 0.0
        %1145 = vmatprep.subr.mxu0 0.0
        %1146 = vmatpush1.msra.mxu0 0.0
        %1147 = vmatprep.subr.mxu0 0.0
        %1148 = vmatpush1.msra.mxu0 0.0
        %1149 = vmatprep.subr.mxu0 0.0
        %1150 = vmatpush1.msra.mxu0 0.0
        %1151 = vmatprep.subr.mxu0 0.0
        %1152 = vmatpush1.msra.mxu0 0.0
        %1153 = vmatprep.subr.mxu0 0.0
        %1154 = vmatpush1.msra.mxu0 0.0
        %1155 = vmatprep.subr.mxu0 0.0
        %1156 = vmatpush1.msra.mxu0 0.0
        %1157 = vmatprep.subr.mxu0 0.0
        %1158 = vmatpush1.msra.mxu0 0.0
        %1159 = vmatprep.subr.mxu0 0.0
        %1160 = vmatpush1.msra.mxu0 0.0
        %1161 = vmatprep.mubr.f32.mxu0 0.0
        %1162 = vmatmul.mubr.f32.gmra.mrb[0].mxu0 %v542
        %v1163 = vpop.f32.mrb[0].mxu0
        %v1164 = vadd.f32 0.0, %v1163
        %v1165 = vpop.f32.mrb[0].mxu0
        %v1166 = vadd.f32 0.0, %v1165
        %1167 = vdwg.mxu0
        %v1168 = vadd.f32 %v891, %v1164
        %v1169 = vadd.f32 %v892, %v1166
        %s1170 = scalar_lea.vmem %s229, 32 [#allocation3]
        %1171 = vst [vmem:[%s1170] sm:$0xff] %v1168
        %1172 = vst [vmem:[%s1170 + $0x8] sm:$0xff] %v1169
        %1173 = vrot.lane.b32.xlu0 %v1168, 15
        %v1174 = vpop.permute.xlu0 %1173
        %1175 = vrot.lane.b32.xlu0 %v1169, 15
        %v1176 = vpop.permute.xlu0 %1175
        %v1177 = vsel %vm312, %v1174, %v1176
        %v1178 = vsel %vm312, %v1176, %v1174
        %1179 = vrot.lane.b32.xlu0 %v1168, 127
        %v1180 = vpop.permute.xlu0 %1179
        %1181 = vrot.lane.b32.xlu0 %v1169, 127
        %v1182 = vpop.permute.xlu0 %1181
        %v1183 = vsel %vm319, %v1180, %v1182
        %v1184 = vsel %vm319, %v1182, %v1180
        %v1185 = vsel %vm241, %v1178, %v1183
        %v1186 = vsel %vm242, %v1177, %v1184
        %1187 = vrot.lane.b32.xlu0 %v1168, 113
        %v1188 = vpop.permute.xlu0 %1187
        %1189 = vrot.lane.b32.xlu0 %v1169, 113
        %v1190 = vpop.permute.xlu0 %1189
        %v1191 = vsel %vm328, %v1188, %v1190
        %v1192 = vsel %vm328, %v1190, %v1188
        %1193 = vrot.lane.b32.xlu0 %v1168, 1
        %v1194 = vpop.permute.xlu0 %1193
        %1195 = vrot.lane.b32.xlu0 %v1169, 1
        %v1196 = vpop.permute.xlu0 %1195
        %v1197 = vsel %vm335, %v1194, %v1196
        %v1198 = vsel %vm335, %v1196, %v1194
        %v1199 = vsel %vm245, %v1191, %v1198
        %v1200 = vsel %vm246, %v1192, %v1197
        %v1201 = vsub.f32 %v1185, %v1199
        %v1202 = vsub.f32 %v1186, %v1200
        %v1203 = vmul.f32 %v1168, 2.0
        %v1204 = vmul.f32 %v1169, 2.0
        %v1205 = vadd.f32 %v1199, %v1203
        %v1206 = vadd.f32 %v1200, %v1204
        %v1207 = vadd.f32 %v1205, %v1185
        %v1208 = vadd.f32 %v1206, %v1186
        %1209 = vrot.lane.b32.xlu0 %v1201, 16
        %v1210 = vpop.permute.xlu0 %1209
        %1211 = vrot.lane.b32.xlu0 %v1202, 16
        %v1212 = vpop.permute.xlu0 %1211
        %v1213 = vsel %vm352, %v1210, %v1212
        %v1214 = vsel %vm352, %v1212, %v1210
        %v1215 = vmul.f32 %v1201, 2.0
        %v1216 = vmul.f32 %v1202, 2.0
        %v1217 = vadd.f32 %v1214, %v1215
        %v1218 = vadd.f32 %v1213, %v1216
        %1219 = vrot.lane.b32.xlu0 %v1201, 112
        %v1220 = vpop.permute.xlu0 %1219
        %1221 = vrot.lane.b32.xlu0 %v1202, 112
        %v1222 = vpop.permute.xlu0 %1221
        %v1223 = vsel %vm363, %v1220, %v1222
        %v1224 = vsel %vm363, %v1222, %v1220
        %v1225 = vadd.f32 %v1217, %v1223
        %v1226 = vadd.f32 %v1218, %v1224
        %v1227 = vmul.f32 %v1225, 0.125
        %v1228 = vmul.f32 %v1226, 0.125
        %1229 = vrot.lane.b32.xlu0 %v1207, 112
        %v1230 = vpop.permute.xlu0 %1229
        %1231 = vrot.lane.b32.xlu0 %v1208, 112
        %v1232 = vpop.permute.xlu0 %1231
        %v1233 = vsel %vm363, %v1230, %v1232
        %v1234 = vsel %vm363, %v1232, %v1230
        %1235 = vrot.lane.b32.xlu0 %v1207, 16
        %v1236 = vpop.permute.xlu0 %1235
        %1237 = vrot.lane.b32.xlu0 %v1208, 16
        %v1238 = vpop.permute.xlu0 %1237
        %v1239 = vsel %vm352, %v1236, %v1238
        %v1240 = vsel %vm352, %v1238, %v1236
        %v1241 = vsub.f32 %v1233, %v1240
        %v1242 = vsub.f32 %v1234, %v1239
        %v1243 = vmul.f32 %v1241, 0.125
        %v1244 = vmul.f32 %v1242, 0.125
        %1245 = vmatprep.subr.mxu0 %v1169
        %1246 = vmatpush1.msra.mxu0 %v1168
        %1247 = vmatprep.subr.mxu0 %v1228
        %1248 = vmatpush1.msra.mxu0 %v1227
        %1249 = vmatprep.subr.mxu0 %v1244
        %1250 = vmatpush1.msra.mxu0 %v1243
        %1251 = vmatprep.subr.mxu0 0.0
        %1252 = vmatpush1.msra.mxu0 0.0
        %1253 = vmatprep.subr.mxu0 0.0
        %1254 = vmatpush1.msra.mxu0 0.0
        %1255 = vmatprep.subr.mxu0 0.0
        %1256 = vmatpush1.msra.mxu0 0.0
        %1257 = vmatprep.subr.mxu0 0.0
        %1258 = vmatpush1.msra.mxu0 0.0
        %1259 = vmatprep.subr.mxu0 0.0
        %1260 = vmatpush1.msra.mxu0 0.0
        %1261 = vmatprep.subr.mxu0 0.0
        %1262 = vmatpush1.msra.mxu0 0.0
        %1263 = vmatprep.subr.mxu0 0.0
        %1264 = vmatpush1.msra.mxu0 0.0
        %1265 = vmatprep.subr.mxu0 0.0
        %1266 = vmatpush1.msra.mxu0 0.0
        %1267 = vmatprep.subr.mxu0 0.0
        %1268 = vmatpush1.msra.mxu0 0.0
        %1269 = vmatprep.subr.mxu0 0.0
        %1270 = vmatpush1.msra.mxu0 0.0
        %1271 = vmatprep.subr.mxu0 0.0
        %1272 = vmatpush1.msra.mxu0 0.0
        %1273 = vmatprep.subr.mxu0 0.0
        %1274 = vmatpush1.msra.mxu0 0.0
        %1275 = vmatprep.subr.mxu0 0.0
        %1276 = vmatpush1.msra.mxu0 0.0
        %1277 = vmatprep.subr.mxu0 0.0
        %1278 = vmatpush1.msra.mxu0 0.0
        %1279 = vmatprep.subr.mxu0 0.0
        %1280 = vmatpush1.msra.mxu0 0.0
        %1281 = vmatprep.subr.mxu0 0.0
        %1282 = vmatpush1.msra.mxu0 0.0
        %1283 = vmatprep.subr.mxu0 0.0
        %1284 = vmatpush1.msra.mxu0 0.0
        %1285 = vmatprep.subr.mxu0 0.0
        %1286 = vmatpush1.msra.mxu0 0.0
        %1287 = vmatprep.subr.mxu0 0.0
        %1288 = vmatpush1.msra.mxu0 0.0
        %1289 = vmatprep.subr.mxu0 0.0
        %1290 = vmatpush1.msra.mxu0 0.0
        %1291 = vmatprep.subr.mxu0 0.0
        %1292 = vmatpush1.msra.mxu0 0.0
        %1293 = vmatprep.subr.mxu0 0.0
        %1294 = vmatpush1.msra.mxu0 0.0
        %1295 = vmatprep.subr.mxu0 0.0
        %1296 = vmatpush1.msra.mxu0 0.0
        %1297 = vmatprep.subr.mxu0 0.0
        %1298 = vmatpush1.msra.mxu0 0.0
        %1299 = vmatprep.subr.mxu0 0.0
        %1300 = vmatpush1.msra.mxu0 0.0
        %1301 = vmatprep.subr.mxu0 0.0
        %1302 = vmatpush1.msra.mxu0 0.0
        %1303 = vmatprep.subr.mxu0 0.0
        %1304 = vmatpush1.msra.mxu0 0.0
        %1305 = vmatprep.subr.mxu0 0.0
        %1306 = vmatpush1.msra.mxu0 0.0
        %1307 = vmatprep.subr.mxu0 0.0
        %1308 = vmatpush1.msra.mxu0 0.0
        %1309 = vmatprep.mubr.f32.mxu0 0.0
        %1310 = vmatmul.mubr.f32.gmra.mrb[0].mxu0 %v388
        %v1311 = vpop.f32.mrb[0].mxu0
        %v1312 = vadd.f32 %v267, %v1311
        %v1313 = vpop.f32.mrb[0].mxu0
        %v1314 = vadd.f32 %v267, %v1313
        %1315 = vmatprep.mubr.f32.mxu0 0.0
        %1316 = vmatmul.mubr.f32.gmra.mrb[0].mxu0 %v391
        %v1317 = vpop.f32.mrb[0].mxu0
        %v1318 = vadd.f32 %v272, %v1317
        %v1319 = vpop.f32.mrb[0].mxu0
        %v1320 = vadd.f32 %v272, %v1319
        %1321 = vmatprep.mubr.f32.mxu0 0.0
        %1322 = vmatmul.mubr.f32.gmra.mrb[0].mxu0 %v394
        %v1323 = vpop.f32.mrb[0].mxu0
        %v1324 = vadd.f32 %v277, %v1323
        %v1325 = vpop.f32.mrb[0].mxu0
        %v1326 = vadd.f32 %v277, %v1325
        %1327 = vmatprep.mubr.f32.mxu0 0.0
        %1328 = vmatmul.mubr.f32.gmra.mrb[0].mxu0 %v397
        %v1329 = vpop.f32.mrb[0].mxu0
        %v1330 = vadd.f32 %v282, %v1329
        %v1331 = vpop.f32.mrb[0].mxu0
        %v1332 = vadd.f32 %v282, %v1331
        %1333 = vmatprep.mubr.f32.mxu0 0.0
        %1334 = vmatmul.mubr.f32.gmra.mrb[0].mxu0 %v400
        %v1335 = vpop.f32.mrb[0].mxu0
        %v1336 = vadd.f32 %v287, %v1335
        %v1337 = vpop.f32.mrb[0].mxu0
        %v1338 = vadd.f32 %v287, %v1337
        %1339 = vmatprep.mubr.f32.mxu0 0.0
        %1340 = vmatmul.mubr.f32.gmra.mrb[0].mxu0 %v403
        %v1341 = vpop.f32.mrb[0].mxu0
        %v1342 = vadd.f32 %v292, %v1341
        %v1343 = vpop.f32.mrb[0].mxu0
        %v1344 = vadd.f32 %v292, %v1343
        %1345 = vmatprep.mubr.f32.mxu0 0.0
        %1346 = vmatmul.mubr.f32.gmra.mrb[0].mxu0 %v406
        %v1347 = vpop.f32.mrb[0].mxu0
        %v1348 = vadd.f32 %v297, %v1347
        %v1349 = vpop.f32.mrb[0].mxu0
        %v1350 = vadd.f32 %v297, %v1349
        %1351 = vmatprep.mubr.f32.mxu0 0.0
        %1352 = vmatmul.mubr.f32.gmra.mrb[0].mxu0 %v409
        %v1353 = vpop.f32.mrb[0].mxu0
        %v1354 = vadd.f32 %v302, %v1353
        %v1355 = vpop.f32.mrb[0].mxu0
        %v1356 = vadd.f32 %v302, %v1355
        %1357 = vdwg.mxu0
        %v1358 = vmax.f32 %v1312, 0.0
        %v1359 = vmax.f32 %v1314, 0.0
        %v1360 = vmax.f32 %v1318, 0.0
        %v1361 = vmax.f32 %v1320, 0.0
        %v1362 = vmax.f32 %v1324, 0.0
        %v1363 = vmax.f32 %v1326, 0.0
        %v1364 = vmax.f32 %v1330, 0.0
        %v1365 = vmax.f32 %v1332, 0.0
        %v1366 = vmax.f32 %v1336, 0.0
        %v1367 = vmax.f32 %v1338, 0.0
        %v1368 = vmax.f32 %v1342, 0.0
        %v1369 = vmax.f32 %v1344, 0.0
        %v1370 = vmax.f32 %v1348, 0.0
        %v1371 = vmax.f32 %v1350, 0.0
        %v1372 = vmax.f32 %v1354, 0.0
        %v1373 = vmax.f32 %v1356, 0.0
        %1374 = vmatprep.subr.mxu0 %v1359
        %1375 = vmatpush1.msra.mxu0 %v1358
        %1376 = vmatprep.subr.mxu0 %v1361
        %1377 = vmatpush1.msra.mxu0 %v1360
        %1378 = vmatprep.subr.mxu0 %v1363
        %1379 = vmatpush1.msra.mxu0 %v1362
        %1380 = vmatprep.subr.mxu0 %v1365
        %1381 = vmatpush1.msra.mxu0 %v1364
        %1382 = vmatprep.subr.mxu0 %v1367
        %1383 = vmatpush1.msra.mxu0 %v1366
        %1384 = vmatprep.subr.mxu0 %v1369
        %1385 = vmatpush1.msra.mxu0 %v1368
        %1386 = vmatprep.subr.mxu0 %v1371
        %1387 = vmatpush1.msra.mxu0 %v1370
        %1388 = vmatprep.subr.mxu0 %v1373
        %1389 = vmatpush1.msra.mxu0 %v1372
        %1390 = vmatprep.subr.mxu0 0.0
        %1391 = vmatpush1.msra.mxu0 0.0
        %1392 = vmatprep.subr.mxu0 0.0
        %1393 = vmatpush1.msra.mxu0 0.0
        %1394 = vmatprep.subr.mxu0 0.0
        %1395 = vmatpush1.msra.mxu0 0.0
        %1396 = vmatprep.subr.mxu0 0.0
        %1397 = vmatpush1.msra.mxu0 0.0
        %1398 = vmatprep.subr.mxu0 0.0
        %1399 = vmatpush1.msra.mxu0 0.0
        %1400 = vmatprep.subr.mxu0 0.0
        %1401 = vmatpush1.msra.mxu0 0.0
        %1402 = vmatprep.subr.mxu0 0.0
        %1403 = vmatpush1.msra.mxu0 0.0
        %1404 = vmatprep.subr.mxu0 0.0
        %1405 = vmatpush1.msra.mxu0 0.0
        %1406 = vmatprep.subr.mxu0 0.0
        %1407 = vmatpush1.msra.mxu0 0.0
        %1408 = vmatprep.subr.mxu0 0.0
        %1409 = vmatpush1.msra.mxu0 0.0
        %1410 = vmatprep.subr.mxu0 0.0
        %1411 = vmatpush1.msra.mxu0 0.0
        %1412 = vmatprep.subr.mxu0 0.0
        %1413 = vmatpush1.msra.mxu0 0.0
        %1414 = vmatprep.subr.mxu0 0.0
        %1415 = vmatpush1.msra.mxu0 0.0
        %1416 = vmatprep.subr.mxu0 0.0
        %1417 = vmatpush1.msra.mxu0 0.0
        %1418 = vmatprep.subr.mxu0 0.0
        %1419 = vmatpush1.msra.mxu0 0.0
        %1420 = vmatprep.subr.mxu0 0.0
        %1421 = vmatpush1.msra.mxu0 0.0
        %1422 = vmatprep.subr.mxu0 0.0
        %1423 = vmatpush1.msra.mxu0 0.0
        %1424 = vmatprep.subr.mxu0 0.0
        %1425 = vmatpush1.msra.mxu0 0.0
        %1426 = vmatprep.subr.mxu0 0.0
        %1427 = vmatpush1.msra.mxu0 0.0
        %1428 = vmatprep.subr.mxu0 0.0
        %1429 = vmatpush1.msra.mxu0 0.0
        %1430 = vmatprep.subr.mxu0 0.0
        %1431 = vmatpush1.msra.mxu0 0.0
        %1432 = vmatprep.subr.mxu0 0.0
        %1433 = vmatpush1.msra.mxu0 0.0
        %1434 = vmatprep.subr.mxu0 0.0
        %1435 = vmatpush1.msra.mxu0 0.0
        %1436 = vmatprep.subr.mxu0 0.0
        %1437 = vmatpush1.msra.mxu0 0.0
        %1438 = vmatprep.mubr.f32.mxu0 0.0
        %1439 = vmatmul.mubr.f32.gmra.mrb[0].mxu0 %v542
        %v1440 = vpop.f32.mrb[0].mxu0
        %v1441 = vadd.f32 0.0, %v1440
        %v1442 = vpop.f32.mrb[0].mxu0
        %v1443 = vadd.f32 0.0, %v1442
        %1444 = vdwg.mxu0
        %v1445 = vadd.f32 %v1168, %v1441
        %v1446 = vadd.f32 %v1169, %v1443
        %s1447 = scalar_lea.vmem %s229, 48 [#allocation3]
        %1448 = vst [vmem:[%s1447] sm:$0xff] %v1445
        %1449 = vst [vmem:[%s1447 + $0x8] sm:$0xff] %v1446
        %1450 = vst [vmem:[#allocation2] sm:$0xff] %v1445
        %1451 = vst [vmem:[#allocation2 + $0x8] sm:$0xff] %v1446
        %s1452 = sand.u32 %s154, 1
        %s1453 = scalar_lea.sflag [#allocation4], %s1452
        %s1454 = sand.u32 %s154, 1
        %s1455 = smul.addr %s1454, 64
        %s1456 = scalar_lea.vmem [#allocation3], %s1455
        // Predicated region
        $region49: #{tpu_custom_call.1} parent=43 // pred_check
          %p1457 = pneg %p164
        $region50: #{tpu_custom_call.1} parent=43 // pred_check_branch
          %1459 = sbr.rel (%p1457) target = $region52
        $region51: #{tpu_custom_call.1} parent=43 // pred_region
          %s1460 = smul.u32 4, %s20
          %s1462 = ssub.s32 1024, 1024
          %1463 = vsyncadd %s1453, %s1462
          %s1464 = smul.addr %s1460, 2
          %s1465 = smul.addr %s1464, 128
          %s1466 = scalar_lea.hbm %s6, %s1465
          %s1467 = sshll.u32 %s1456, 4
          %s1468 = int_to_ptr.vmem [resolvable:$true] %s1467
          %1473 = dma.vmem_to_hbm [thread:$0]  %s1468, 1024, %s1466, %s1453, 256, 256, 16
        $region52: #{tpu_custom_call.1} parent=43 // pred_fallthru
          _
      $region44: #{tpu_custom_call.1} parent=5 // pred_fallthru
        _
      %p1474 = scmp.le.s32.totalorder 2, %s15
      // Predicated region
      $region53: #{tpu_custom_call.1} parent=5 // pred_check
        %p1475 = pneg %p1474
      $region54: #{tpu_custom_call.1} parent=5 // pred_check_branch
        %1477 = sbr.rel (%p1475) target = $region56
      $region55: #{tpu_custom_call.1} parent=5 // pred_region
        %s1478 = ssub.s32 %s15, 2
        // Predicated region
        $region57: #{tpu_custom_call.1} parent=55 // pred_check
          %p1479 = pneg %p170
        $region58: #{tpu_custom_call.1} parent=55 // pred_check_branch
          %1481 = sbr.rel (%p1479) target = $region60
        $region59: #{tpu_custom_call.1} parent=55 // pred_region
          %s1482 = sand.u32 %s155, 1
          %s1483 = scalar_lea.sflag [#allocation4], %s1482
          %s1484 = sand.u32 %s155, 1
          %s1485 = smul.addr %s1484, 64
          %s1486 = scalar_lea.vmem [#allocation3], %s1485
          %1487 = dma.done %s1483, 1024
        $region60: #{tpu_custom_call.1} parent=55 // pred_fallthru
          _
      $region56: #{tpu_custom_call.1} parent=5 // pred_fallthru
        _
    $region6: #{tpu_custom_call.1} parent=1 // loop_footer
      %s19 = sadd.s32 1, %s15
    $region7: #{tpu_custom_call.1} parent=1 // loop_footer_branch
      %14 = sbr.rel target = $region3
    $region8: #{tpu_custom_call.1} parent=1 // loop_exit
      _
    %1488 = vsyncpa [#allocation4], 1
    %s1489 = scalar_lea.sflag [#allocation4], 1
    %1490 = vsyncpa %s1489, 1

</llo_original>
